<compile_context>
chip_gen: v7x
topology: tpu7x:2x2x1
jax: 0.10.0
libtpu: 0.0.40
codegen_flags: <defaults>
</compile_context>

<pallas_src>
import functools

import jax
import jax.numpy as jnp
from jax.experimental import pallas as pl
from jax.experimental.pallas import tpu as pltpu


# ----------------------------------------------------------------------------
# Fused kernel: [conv3x3 -> InstanceNorm(affine) -> LeakyReLU] x n_stages
# for ONE image of the batch (grid axis = batch).
# ----------------------------------------------------------------------------
def _unet_stack_kernel(x_ref, w_ref, g_ref, beta_ref, o_ref,
                       abuf_ref, cols_ref, *,
                       H, W, KH, KW, Cin, Cmax, Cout, n_stages, guard,
                       eps, neg_slope):
    # x_ref:    (1, Cin, S)                  input image, spatial flattened (S=H*W)
    # w_ref:    (n_stages, Cout, KH*KW*Cmax) packed conv weights (Cin zero-padded)
    # g_ref:    (n_stages, Cout, 1)          InstanceNorm gamma
    # beta_ref: (n_stages, Cout, 1)          InstanceNorm beta
    # o_ref:    (1, Cout, S)                 output of the last stage
    # abuf_ref: (Cmax, guard + S + guard)    activation buffer with zero guards
    # cols_ref: (KH*KW*Cmax, S)              im2col staging buffer
    S = H * W
    G = guard

    # Reset activation buffer: guards (and unused channel rows) must read zero
    # so out-of-image taps contribute nothing; then place this image's input.
    abuf_ref[...] = jnp.zeros_like(abuf_ref)
    abuf_ref[0:Cin, G:G + S] = x_ref[0]

    # Column-edge masks for horizontal taps: a flat shift by dx must not pick up
    # the neighbouring row's edge pixels. Computed once, reused by every stage.
    col = jax.lax.broadcasted_iota(jnp.int32, (1, S), 1) % W
    edge_masks = {}
    for kx in range(KW):
        dx = kx - (KW - 1) // 2
        if dx != 0:
            edge_masks[kx] = ((col + dx >= 0) & (col + dx < W)).astype(jnp.float32)

    for s in range(n_stages):
        # ---- im2col: each tap is a flat lane-shifted window of abuf ---------
        for ky in range(KH):
            for kx in range(KW):
                d = (ky - (KH - 1) // 2) * W + (kx - (KW - 1) // 2)
                tap = abuf_ref[:, G + d:G + d + S]            # (Cmax, S)
                if kx in edge_masks:
                    tap = tap * edge_masks[kx]
                t = ky * KW + kx
                cols_ref[t * Cmax:(t + 1) * Cmax, :] = tap

        # ---- conv: ONE MXU matmul, K = KH*KW*Cmax ----------------------------
        y = jnp.dot(w_ref[s], cols_ref[...],
                    preferred_element_type=jnp.float32)       # (Cout, S)
        # conv bias intentionally omitted: a per-channel constant is cancelled
        # exactly by the InstanceNorm mean subtraction below.

        # ---- InstanceNorm (per channel over spatial) + LeakyReLU -------------
        mean = jnp.mean(y, axis=1, keepdims=True)             # (Cout, 1)
        yc = y - mean
        var = jnp.mean(yc * yc, axis=1, keepdims=True)
        act = yc * jax.lax.rsqrt(var + eps) * g_ref[s] + beta_ref[s]
        act = jnp.where(act >= 0, act, neg_slope * act)

        if s + 1 < n_stages:
            abuf_ref[0:Cout, G:G + S] = act                   # next stage input
        else:
            o_ref[0] = act


# ----------------------------------------------------------------------------
# UnetStackedBlock forward: single fused pallas_call over the whole stack
# ----------------------------------------------------------------------------
def unet_stacked_block_forward(x_nchw, params, *, eps=1e-5, neg_slope=0.01):
    """x_nchw: (N, Cin, H, W) float32 (PyTorch NCHW). Returns (N, Cout, H, W)."""
    N, Cin, H, W = x_nchw.shape
    stages = [stage for block in params for stage in block]
    n_stages = len(stages)
    KH, KW, _, Cout = stages[0]["w"].shape
    Cmax = max(Cin, Cout)
    S = H * W
    guard = 128  # lane-aligned interior offset; must cover the max tap shift
    assert guard >= ((KH - 1) // 2) * W + (KW - 1) // 2

    # Pack per-stage weights to (Cout, KH*KW*Cmax), matching the kernel's tap
    # stacking order (tap-major, channel-minor); zero-pad input channels to Cmax.
    wms, gms, bms = [], [], []
    for stage in stages:
        w = stage["w"]                               # (KH, KW, Cin_s, Cout) HWIO
        cin_s = w.shape[2]
        wt = jnp.transpose(w, (3, 0, 1, 2))          # (Cout, KH, KW, Cin_s)
        wt = jnp.pad(wt, ((0, 0), (0, 0), (0, 0), (0, Cmax - cin_s)))
        wms.append(wt.reshape(Cout, KH * KW * Cmax))
        gms.append(stage["gamma"].reshape(Cout, 1))
        bms.append(stage["beta"].reshape(Cout, 1))
        # stage["b"] (conv bias) is not passed: InstanceNorm cancels it exactly.
    wmat = jnp.stack(wms).astype(jnp.float32)        # (n_stages, Cout, KH*KW*Cmax)
    gmat = jnp.stack(gms).astype(jnp.float32)        # (n_stages, Cout, 1)
    bmat = jnp.stack(bms).astype(jnp.float32)        # (n_stages, Cout, 1)

    x_flat = x_nchw.reshape(N, Cin, S).astype(jnp.float32)   # free reshape, NCHW

    kernel = functools.partial(
        _unet_stack_kernel, H=H, W=W, KH=KH, KW=KW, Cin=Cin, Cmax=Cmax,
        Cout=Cout, n_stages=n_stages, guard=guard, eps=eps, neg_slope=neg_slope)

    out_flat = pl.pallas_call(
        kernel,
        out_shape=jax.ShapeDtypeStruct((N, Cout, S), jnp.float32),
        grid_spec=pltpu.PrefetchScalarGridSpec(
            num_scalar_prefetch=0,
            grid=(N,),
            in_specs=[
                pl.BlockSpec((1, Cin, S), lambda n: (n, 0, 0)),
                pl.BlockSpec((n_stages, Cout, KH * KW * Cmax),
                             lambda n: (0, 0, 0)),
                pl.BlockSpec((n_stages, Cout, 1), lambda n: (0, 0, 0)),
                pl.BlockSpec((n_stages, Cout, 1), lambda n: (0, 0, 0)),
            ],
            out_specs=pl.BlockSpec((1, Cout, S), lambda n: (n, 0, 0)),
            scratch_shapes=[
                pltpu.VMEM((Cmax, guard + S + guard), jnp.float32),
                pltpu.VMEM((KH * KW * Cmax, S), jnp.float32),
            ],
        ),
        compiler_params=pltpu.CompilerParams(
            dimension_semantics=("parallel",)),
    )(x_flat, wmat, gmat, bmat)

    return out_flat.reshape(N, Cout, H, W)           # back to NCHW (free reshape)


# ----------------------------------------------------------------------------
# Deterministic parameter init (shapes follow UnetBasicBlock.__init__)
# ----------------------------------------------------------------------------
def init_params(key, n_blocks, in_channels, out_channels, k):
    params = []
    c_prev = in_channels
    for _ in range(n_blocks):
        block = []
        for (ci, co) in [(c_prev, out_channels), (out_channels, out_channels)]:
            key, kw, kb = jax.random.split(key, 3)
            w = jax.random.normal(kw, (k, k, ci, co), jnp.float32)
            w = w * (1.0 / (k * k * ci)) ** 0.5
            b = 0.1 * jax.random.normal(kb, (1, co), jnp.float32)
            gamma = 1.0 + 0.05 * jnp.arange(co, dtype=jnp.float32)[None, :]
            beta = 0.02 * jnp.arange(co, dtype=jnp.float32)[None, :]
            block.append({"w": w, "b": b, "gamma": gamma, "beta": beta})
        c_prev = out_channels
        params.append(block)
    return params


# ----------------------------------------------------------------------------
# Pure-JAX reference (XLA conv, bias included) for a numerical sanity check
# ----------------------------------------------------------------------------
def _ref_stage(x_nhwc, w, b, gamma, beta, eps=1e-5, neg_slope=0.01):
    y = jax.lax.conv_general_dilated(
        x_nhwc, w, window_strides=(1, 1), padding="SAME",
        dimension_numbers=("NHWC", "HWIO", "NHWC")) + b.reshape(1, 1, 1, -1)
    mean = jnp.mean(y, axis=(1, 2), keepdims=True)
    var = jnp.mean(jnp.square(y - mean), axis=(1, 2), keepdims=True)
    yhat = (y - mean) * jax.lax.rsqrt(var + eps)
    y = yhat * gamma.reshape(1, 1, 1, -1) + beta.reshape(1, 1, 1, -1)
    return jnp.where(y >= 0, y, neg_slope * y)


def reference_forward(x_nchw, params):
    x = jnp.transpose(x_nchw, (0, 2, 3, 1))
    for block in params:
        for s in block:
            x = _ref_stage(x, s["w"], s["b"], s["gamma"], s["beta"])
    return jnp.transpose(x, (0, 3, 1, 2))


if __name__ == "__main__":
    # Small config consistent with the module:
    # n_blocks=2, spatial_dims=2, in_channels=4, out_channels=8,
    # kernel_size=3, stride=1, norm=instance(affine), act=leakyrelu(0.01).
    N, Cin, H, W = 2, 4, 16, 16
    Cout, K, n_blocks = 8, 3, 2

    key = jax.random.PRNGKey(0)
    k_x, k_p = jax.random.split(key)
    x = jax.random.normal(k_x, (N, Cin, H, W), jnp.float32)
    params = init_params(k_p, n_blocks, Cin, Cout, K)

    fwd = jax.jit(unet_stacked_block_forward)
    out = jax.block_until_ready(fwd(x, params))

    assert out.shape == (N, Cout, H, W)
    assert bool(jnp.all(jnp.isfinite(out)))

    ref = reference_forward(x, params)
    max_err = float(jnp.max(jnp.abs(out - ref)))
    assert max_err < 5e-2, f"max abs err {max_err}"

    print("KERNEL_OK")
</pallas_src>

<mosaic_0001>
module attributes {stable_mosaic.version = 11 : i64} {
  func.func @_unet_stack_kernel(%arg0: i32, %arg1: memref<1x4x256xf32, #tpu.memory_space<vmem>>, %arg2: memref<4x8x72xf32, #tpu.memory_space<vmem>>, %arg3: memref<4x8x1xf32, #tpu.memory_space<vmem>>, %arg4: memref<4x8x1xf32, #tpu.memory_space<vmem>>, %arg5: memref<1x8x256xf32, #tpu.memory_space<vmem>>, %arg6: memref<8x512xf32, #tpu.memory_space<vmem>>, %arg7: memref<72x256xf32, #tpu.memory_space<vmem>>) attributes {dimension_semantics = [#tpu.dimension_semantics<parallel>], iteration_bounds = array<i64: 2>, scalar_prefetch = 0 : i64, scratch_operands = 2 : i64, tpu.core_type = #tpu.core_type<tc>, window_params = [{transform_indices = @transform_0, window_bounds = array<i64: 1, 4, 256>}, {pipeline_mode = #tpu.pipeline_mode<synchronous>, transform_indices = @transform_1, window_bounds = array<i64: 4, 8, 72>}, {pipeline_mode = #tpu.pipeline_mode<synchronous>, transform_indices = @transform_2, window_bounds = array<i64: 4, 8, 1>}, {pipeline_mode = #tpu.pipeline_mode<synchronous>, transform_indices = @transform_3, window_bounds = array<i64: 4, 8, 1>}, {transform_indices = @transform_4, window_bounds = array<i64: 1, 8, 256>}]} {
    %cst = arith.constant 0.000000e+00 : f32
    %0 = vector.broadcast %cst : f32 to vector<8x512xf32>
    %c0 = arith.constant 0 : index
    %c0_0 = arith.constant 0 : index
    %1 = vector.load %arg6[%c0, %c0_0] : memref<8x512xf32, #tpu.memory_space<vmem>>, vector<8x512xf32>
    tpu.vector_store %arg6[%c0, %c0_0], %0 {strides = array<i32>} : memref<8x512xf32, #tpu.memory_space<vmem>>, vector<8x512xf32>,
    %c0_1 = arith.constant 0 : index
    %c0_2 = arith.constant 0 : index
    %c0_3 = arith.constant 0 : index
    %2 = vector.load %arg1[%c0_1, %c0_2, %c0_3] : memref<1x4x256xf32, #tpu.memory_space<vmem>>, vector<1x4x256xf32>
    %3 = vector.shape_cast %2 : vector<1x4x256xf32> to vector<4x256xf32>
    %c0_4 = arith.constant 0 : index
    %c128 = arith.constant 128 : index
    %4 = vector.load %arg6[%c0_4, %c128] : memref<8x512xf32, #tpu.memory_space<vmem>>, vector<4x256xf32>
    tpu.vector_store %arg6[%c0_4, %c128], %3 {strides = array<i32>} : memref<8x512xf32, #tpu.memory_space<vmem>>, vector<4x256xf32>,
    %5 = tpu.iota {dimensions = array<i32: 1>} : vector<1x256xi32>
    %c16_i32 = arith.constant 16 : i32
    %c0_i32 = arith.constant 0 : i32
    %6 = arith.cmpi eq, %c16_i32, %c0_i32 : i32
    %c1_i32 = arith.constant 1 : i32
    %7 = arith.select %6, %c1_i32, %c16_i32 : i32
    %8 = vector.broadcast %7 : i32 to vector<1x256xi32>
    %9 = arith.remsi %5, %8 : vector<1x256xi32>
    %c0_i32_5 = arith.constant 0 : i32
    %10 = vector.broadcast %c0_i32_5 : i32 to vector<1x256xi32>
    %11 = arith.cmpi ne, %9, %10 : vector<1x256xi32>
    %c0_i32_6 = arith.constant 0 : i32
    %12 = vector.broadcast %c0_i32_6 : i32 to vector<1x256xi32>
    %13 = arith.cmpi slt, %9, %12 : vector<1x256xi32>
    %c0_i32_7 = arith.constant 0 : i32
    %14 = arith.cmpi slt, %7, %c0_i32_7 : i32
    %15 = vector.broadcast %14 : i1 to vector<1x256xi1>
    %16 = vector.broadcast %15 : vector<1x256xi1> to vector<1x256xi1>
    %17 = arith.xori %13, %16 : vector<1x256xi1>
    %18 = arith.andi %17, %11 : vector<1x256xi1>
    %19 = vector.broadcast %7 : i32 to vector<1x256xi32>
    %20 = arith.addi %9, %19 : vector<1x256xi32>
    %21 = arith.select %18, %20, %9 : vector<1x256xi1>, vector<1x256xi32>
    %c-1_i32 = arith.constant -1 : i32
    %22 = vector.broadcast %c-1_i32 : i32 to vector<1x256xi32>
    %23 = arith.addi %21, %22 : vector<1x256xi32>
    %c0_i32_8 = arith.constant 0 : i32
    %24 = vector.broadcast %c0_i32_8 : i32 to vector<1x256xi32>
    %25 = arith.cmpi sge, %23, %24 : vector<1x256xi32>
    %c-1_i32_9 = arith.constant -1 : i32
    %26 = vector.broadcast %c-1_i32_9 : i32 to vector<1x256xi32>
    %27 = arith.addi %21, %26 : vector<1x256xi32>
    %c16_i32_10 = arith.constant 16 : i32
    %28 = vector.broadcast %c16_i32_10 : i32 to vector<1x256xi32>
    %29 = arith.cmpi slt, %27, %28 : vector<1x256xi32>
    %30 = arith.andi %25, %29 : vector<1x256xi1>
    %31 = arith.extui %30 : vector<1x256xi1> to vector<1x256xi32>
    %32 = arith.sitofp %31 : vector<1x256xi32> to vector<1x256xf32>
    %c1_i32_11 = arith.constant 1 : i32
    %33 = vector.broadcast %c1_i32_11 : i32 to vector<1x256xi32>
    %34 = arith.addi %21, %33 : vector<1x256xi32>
    %c0_i32_12 = arith.constant 0 : i32
    %35 = vector.broadcast %c0_i32_12 : i32 to vector<1x256xi32>
    %36 = arith.cmpi sge, %34, %35 : vector<1x256xi32>
    %c1_i32_13 = arith.constant 1 : i32
    %37 = vector.broadcast %c1_i32_13 : i32 to vector<1x256xi32>
    %38 = arith.addi %21, %37 : vector<1x256xi32>
    %c16_i32_14 = arith.constant 16 : i32
    %39 = vector.broadcast %c16_i32_14 : i32 to vector<1x256xi32>
    %40 = arith.cmpi slt, %38, %39 : vector<1x256xi32>
    %41 = arith.andi %36, %40 : vector<1x256xi1>
    %42 = arith.extui %41 : vector<1x256xi1> to vector<1x256xi32>
    %43 = arith.sitofp %42 : vector<1x256xi32> to vector<1x256xf32>
    %c0_15 = arith.constant 0 : index
    %c111 = arith.constant 111 : index
    %44 = vector.load %arg6[%c0_15, %c111] : memref<8x512xf32, #tpu.memory_space<vmem>>, vector<8x256xf32>
    %45 = vector.broadcast %32 : vector<1x256xf32> to vector<8x256xf32>
    %46 = arith.mulf %44, %45 : vector<8x256xf32>
    %c0_16 = arith.constant 0 : index
    %c0_17 = arith.constant 0 : index
    %47 = vector.load %arg7[%c0_16, %c0_17] : memref<72x256xf32, #tpu.memory_space<vmem>>, vector<8x256xf32>
    tpu.vector_store %arg7[%c0_16, %c0_17], %46 {strides = array<i32>} : memref<72x256xf32, #tpu.memory_space<vmem>>, vector<8x256xf32>,
    %c0_18 = arith.constant 0 : index
    %c112 = arith.constant 112 : index
    %48 = vector.load %arg6[%c0_18, %c112] : memref<8x512xf32, #tpu.memory_space<vmem>>, vector<8x256xf32>
    %c8 = arith.constant 8 : index
    %c0_19 = arith.constant 0 : index
    %49 = vector.load %arg7[%c8, %c0_19] : memref<72x256xf32, #tpu.memory_space<vmem>>, vector<8x256xf32>
    tpu.vector_store %arg7[%c8, %c0_19], %48 {strides = array<i32>} : memref<72x256xf32, #tpu.memory_space<vmem>>, vector<8x256xf32>,
    %c0_20 = arith.constant 0 : index
    %c113 = arith.constant 113 : index
    %50 = vector.load %arg6[%c0_20, %c113] : memref<8x512xf32, #tpu.memory_space<vmem>>, vector<8x256xf32>
    %51 = vector.broadcast %43 : vector<1x256xf32> to vector<8x256xf32>
    %52 = arith.mulf %50, %51 : vector<8x256xf32>
    %c16 = arith.constant 16 : index
    %c0_21 = arith.constant 0 : index
    %53 = vector.load %arg7[%c16, %c0_21] : memref<72x256xf32, #tpu.memory_space<vmem>>, vector<8x256xf32>
    tpu.vector_store %arg7[%c16, %c0_21], %52 {strides = array<i32>} : memref<72x256xf32, #tpu.memory_space<vmem>>, vector<8x256xf32>,
    %c0_22 = arith.constant 0 : index
    %c127 = arith.constant 127 : index
    %54 = vector.load %arg6[%c0_22, %c127] : memref<8x512xf32, #tpu.memory_space<vmem>>, vector<8x256xf32>
    %55 = vector.broadcast %32 : vector<1x256xf32> to vector<8x256xf32>
    %56 = arith.mulf %54, %55 : vector<8x256xf32>
    %c24 = arith.constant 24 : index
    %c0_23 = arith.constant 0 : index
    %57 = vector.load %arg7[%c24, %c0_23] : memref<72x256xf32, #tpu.memory_space<vmem>>, vector<8x256xf32>
    tpu.vector_store %arg7[%c24, %c0_23], %56 {strides = array<i32>} : memref<72x256xf32, #tpu.memory_space<vmem>>, vector<8x256xf32>,
    %c0_24 = arith.constant 0 : index
    %c128_25 = arith.constant 128 : index
    %58 = vector.load %arg6[%c0_24, %c128_25] : memref<8x512xf32, #tpu.memory_space<vmem>>, vector<8x256xf32>
    %c32 = arith.constant 32 : index
    %c0_26 = arith.constant 0 : index
    %59 = vector.load %arg7[%c32, %c0_26] : memref<72x256xf32, #tpu.memory_space<vmem>>, vector<8x256xf32>
    tpu.vector_store %arg7[%c32, %c0_26], %58 {strides = array<i32>} : memref<72x256xf32, #tpu.memory_space<vmem>>, vector<8x256xf32>,
    %c0_27 = arith.constant 0 : index
    %c129 = arith.constant 129 : index
    %60 = vector.load %arg6[%c0_27, %c129] : memref<8x512xf32, #tpu.memory_space<vmem>>, vector<8x256xf32>
    %61 = vector.broadcast %43 : vector<1x256xf32> to vector<8x256xf32>
    %62 = arith.mulf %60, %61 : vector<8x256xf32>
    %c40 = arith.constant 40 : index
    %c0_28 = arith.constant 0 : index
    %63 = vector.load %arg7[%c40, %c0_28] : memref<72x256xf32, #tpu.memory_space<vmem>>, vector<8x256xf32>
    tpu.vector_store %arg7[%c40, %c0_28], %62 {strides = array<i32>} : memref<72x256xf32, #tpu.memory_space<vmem>>, vector<8x256xf32>,
    %c0_29 = arith.constant 0 : index
    %c143 = arith.constant 143 : index
    %64 = vector.load %arg6[%c0_29, %c143] : memref<8x512xf32, #tpu.memory_space<vmem>>, vector<8x256xf32>
    %65 = vector.broadcast %32 : vector<1x256xf32> to vector<8x256xf32>
    %66 = arith.mulf %64, %65 : vector<8x256xf32>
    %c48 = arith.constant 48 : index
    %c0_30 = arith.constant 0 : index
    %67 = vector.load %arg7[%c48, %c0_30] : memref<72x256xf32, #tpu.memory_space<vmem>>, vector<8x256xf32>
    tpu.vector_store %arg7[%c48, %c0_30], %66 {strides = array<i32>} : memref<72x256xf32, #tpu.memory_space<vmem>>, vector<8x256xf32>,
    %c0_31 = arith.constant 0 : index
    %c144 = arith.constant 144 : index
    %68 = vector.load %arg6[%c0_31, %c144] : memref<8x512xf32, #tpu.memory_space<vmem>>, vector<8x256xf32>
    %c56 = arith.constant 56 : index
    %c0_32 = arith.constant 0 : index
    %69 = vector.load %arg7[%c56, %c0_32] : memref<72x256xf32, #tpu.memory_space<vmem>>, vector<8x256xf32>
    tpu.vector_store %arg7[%c56, %c0_32], %68 {strides = array<i32>} : memref<72x256xf32, #tpu.memory_space<vmem>>, vector<8x256xf32>,
    %c0_33 = arith.constant 0 : index
    %c145 = arith.constant 145 : index
    %70 = vector.load %arg6[%c0_33, %c145] : memref<8x512xf32, #tpu.memory_space<vmem>>, vector<8x256xf32>
    %71 = vector.broadcast %43 : vector<1x256xf32> to vector<8x256xf32>
    %72 = arith.mulf %70, %71 : vector<8x256xf32>
    %c64 = arith.constant 64 : index
    %c0_34 = arith.constant 0 : index
    %73 = vector.load %arg7[%c64, %c0_34] : memref<72x256xf32, #tpu.memory_space<vmem>>, vector<8x256xf32>
    tpu.vector_store %arg7[%c64, %c0_34], %72 {strides = array<i32>} : memref<72x256xf32, #tpu.memory_space<vmem>>, vector<8x256xf32>,
    %c0_35 = arith.constant 0 : index
    %c0_36 = arith.constant 0 : index
    %c0_37 = arith.constant 0 : index
    %74 = vector.load %arg2[%c0_35, %c0_36, %c0_37] : memref<4x8x72xf32, #tpu.memory_space<vmem>>, vector<1x8x72xf32>
    %75 = vector.shape_cast %74 : vector<1x8x72xf32> to vector<8x72xf32>
    %c0_38 = arith.constant 0 : index
    %c0_39 = arith.constant 0 : index
    %76 = vector.load %arg7[%c0_38, %c0_39] : memref<72x256xf32, #tpu.memory_space<vmem>>, vector<72x256xf32>
    %cst_40 = arith.constant dense<0.000000e+00> : vector<8x256xf32>
    %77 = tpu.matmul %75, %76, %cst_40 {dimension_numbers = #tpu.dot_dimension_numbers<[1], [0], [0], [1], [0, 0, 1, 1], [], []>} : vector<8x72xf32>, vector<72x256xf32>, vector<8x256xf32> -> vector<8x256xf32>
    %cst_41 = arith.constant dense<0.000000e+00> : vector<8xf32>
    %78 = vector.multi_reduction <add>, %77, %cst_41 [1] : vector<8x256xf32> to vector<8xf32>
    %79 = vector.shape_cast %78 : vector<8xf32> to vector<8x1xf32>
    %cst_42 = arith.constant 2.560000e+02 : f32
    %80 = vector.broadcast %cst_42 : f32 to vector<8x1xf32>
    %81 = arith.divf %79, %80 : vector<8x1xf32>
    %82 = vector.broadcast %81 : vector<8x1xf32> to vector<8x256xf32>
    %83 = arith.subf %77, %82 : vector<8x256xf32>
    %84 = arith.mulf %83, %83 : vector<8x256xf32>
    %cst_43 = arith.constant dense<0.000000e+00> : vector<8xf32>
    %85 = vector.multi_reduction <add>, %84, %cst_43 [1] : vector<8x256xf32> to vector<8xf32>
    %86 = vector.shape_cast %85 : vector<8xf32> to vector<8x1xf32>
    %cst_44 = arith.constant 2.560000e+02 : f32
    %87 = vector.broadcast %cst_44 : f32 to vector<8x1xf32>
    %88 = arith.divf %86, %87 : vector<8x1xf32>
    %cst_45 = arith.constant 9.99999974E-6 : f32
    %89 = vector.broadcast %cst_45 : f32 to vector<8x1xf32>
    %90 = arith.addf %88, %89 : vector<8x1xf32>
    %91 = math.rsqrt %90 : vector<8x1xf32>
    %92 = vector.broadcast %91 : vector<8x1xf32> to vector<8x256xf32>
    %93 = arith.mulf %83, %92 : vector<8x256xf32>
    %c0_46 = arith.constant 0 : index
    %c0_47 = arith.constant 0 : index
    %c0_48 = arith.constant 0 : index
    %94 = vector.load %arg3[%c0_46, %c0_47, %c0_48] : memref<4x8x1xf32, #tpu.memory_space<vmem>>, vector<1x8x1xf32>
    %95 = vector.shape_cast %94 : vector<1x8x1xf32> to vector<8x1xf32>
    %96 = vector.broadcast %95 : vector<8x1xf32> to vector<8x256xf32>
    %97 = arith.mulf %93, %96 : vector<8x256xf32>
    %c0_49 = arith.constant 0 : index
    %c0_50 = arith.constant 0 : index
    %c0_51 = arith.constant 0 : index
    %98 = vector.load %arg4[%c0_49, %c0_50, %c0_51] : memref<4x8x1xf32, #tpu.memory_space<vmem>>, vector<1x8x1xf32>
    %99 = vector.shape_cast %98 : vector<1x8x1xf32> to vector<8x1xf32>
    %100 = vector.broadcast %99 : vector<8x1xf32> to vector<8x256xf32>
    %101 = arith.addf %97, %100 : vector<8x256xf32>
    %cst_52 = arith.constant 0.000000e+00 : f32
    %102 = vector.broadcast %cst_52 : f32 to vector<8x256xf32>
    %103 = arith.cmpf oge, %101, %102 : vector<8x256xf32>
    %cst_53 = arith.constant 0.00999999977 : f32
    %104 = vector.broadcast %cst_53 : f32 to vector<8x256xf32>
    %105 = arith.mulf %104, %101 : vector<8x256xf32>
    %106 = arith.select %103, %101, %105 : vector<8x256xi1>, vector<8x256xf32>
    %c0_54 = arith.constant 0 : index
    %c128_55 = arith.constant 128 : index
    %107 = vector.load %arg6[%c0_54, %c128_55] : memref<8x512xf32, #tpu.memory_space<vmem>>, vector<8x256xf32>
    tpu.vector_store %arg6[%c0_54, %c128_55], %106 {strides = array<i32>} : memref<8x512xf32, #tpu.memory_space<vmem>>, vector<8x256xf32>,
    %c0_56 = arith.constant 0 : index
    %c111_57 = arith.constant 111 : index
    %108 = vector.load %arg6[%c0_56, %c111_57] : memref<8x512xf32, #tpu.memory_space<vmem>>, vector<8x256xf32>
    %109 = vector.broadcast %32 : vector<1x256xf32> to vector<8x256xf32>
    %110 = arith.mulf %108, %109 : vector<8x256xf32>
    %c0_58 = arith.constant 0 : index
    %c0_59 = arith.constant 0 : index
    %111 = vector.load %arg7[%c0_58, %c0_59] : memref<72x256xf32, #tpu.memory_space<vmem>>, vector<8x256xf32>
    tpu.vector_store %arg7[%c0_58, %c0_59], %110 {strides = array<i32>} : memref<72x256xf32, #tpu.memory_space<vmem>>, vector<8x256xf32>,
    %c0_60 = arith.constant 0 : index
    %c112_61 = arith.constant 112 : index
    %112 = vector.load %arg6[%c0_60, %c112_61] : memref<8x512xf32, #tpu.memory_space<vmem>>, vector<8x256xf32>
    %c8_62 = arith.constant 8 : index
    %c0_63 = arith.constant 0 : index
    %113 = vector.load %arg7[%c8_62, %c0_63] : memref<72x256xf32, #tpu.memory_space<vmem>>, vector<8x256xf32>
    tpu.vector_store %arg7[%c8_62, %c0_63], %112 {strides = array<i32>} : memref<72x256xf32, #tpu.memory_space<vmem>>, vector<8x256xf32>,
    %c0_64 = arith.constant 0 : index
    %c113_65 = arith.constant 113 : index
    %114 = vector.load %arg6[%c0_64, %c113_65] : memref<8x512xf32, #tpu.memory_space<vmem>>, vector<8x256xf32>
    %115 = vector.broadcast %43 : vector<1x256xf32> to vector<8x256xf32>
    %116 = arith.mulf %114, %115 : vector<8x256xf32>
    %c16_66 = arith.constant 16 : index
    %c0_67 = arith.constant 0 : index
    %117 = vector.load %arg7[%c16_66, %c0_67] : memref<72x256xf32, #tpu.memory_space<vmem>>, vector<8x256xf32>
    tpu.vector_store %arg7[%c16_66, %c0_67], %116 {strides = array<i32>} : memref<72x256xf32, #tpu.memory_space<vmem>>, vector<8x256xf32>,
    %c0_68 = arith.constant 0 : index
    %c127_69 = arith.constant 127 : index
    %118 = vector.load %arg6[%c0_68, %c127_69] : memref<8x512xf32, #tpu.memory_space<vmem>>, vector<8x256xf32>
    %119 = vector.broadcast %32 : vector<1x256xf32> to vector<8x256xf32>
    %120 = arith.mulf %118, %119 : vector<8x256xf32>
    %c24_70 = arith.constant 24 : index
    %c0_71 = arith.constant 0 : index
    %121 = vector.load %arg7[%c24_70, %c0_71] : memref<72x256xf32, #tpu.memory_space<vmem>>, vector<8x256xf32>
    tpu.vector_store %arg7[%c24_70, %c0_71], %120 {strides = array<i32>} : memref<72x256xf32, #tpu.memory_space<vmem>>, vector<8x256xf32>,
    %c0_72 = arith.constant 0 : index
    %c128_73 = arith.constant 128 : index
    %122 = vector.load %arg6[%c0_72, %c128_73] : memref<8x512xf32, #tpu.memory_space<vmem>>, vector<8x256xf32>
    %c32_74 = arith.constant 32 : index
    %c0_75 = arith.constant 0 : index
    %123 = vector.load %arg7[%c32_74, %c0_75] : memref<72x256xf32, #tpu.memory_space<vmem>>, vector<8x256xf32>
    tpu.vector_store %arg7[%c32_74, %c0_75], %122 {strides = array<i32>} : memref<72x256xf32, #tpu.memory_space<vmem>>, vector<8x256xf32>,
    %c0_76 = arith.constant 0 : index
    %c129_77 = arith.constant 129 : index
    %124 = vector.load %arg6[%c0_76, %c129_77] : memref<8x512xf32, #tpu.memory_space<vmem>>, vector<8x256xf32>
    %125 = vector.broadcast %43 : vector<1x256xf32> to vector<8x256xf32>
    %126 = arith.mulf %124, %125 : vector<8x256xf32>
    %c40_78 = arith.constant 40 : index
    %c0_79 = arith.constant 0 : index
    %127 = vector.load %arg7[%c40_78, %c0_79] : memref<72x256xf32, #tpu.memory_space<vmem>>, vector<8x256xf32>
    tpu.vector_store %arg7[%c40_78, %c0_79], %126 {strides = array<i32>} : memref<72x256xf32, #tpu.memory_space<vmem>>, vector<8x256xf32>,
    %c0_80 = arith.constant 0 : index
    %c143_81 = arith.constant 143 : index
    %128 = vector.load %arg6[%c0_80, %c143_81] : memref<8x512xf32, #tpu.memory_space<vmem>>, vector<8x256xf32>
    %129 = vector.broadcast %32 : vector<1x256xf32> to vector<8x256xf32>
    %130 = arith.mulf %128, %129 : vector<8x256xf32>
    %c48_82 = arith.constant 48 : index
    %c0_83 = arith.constant 0 : index
    %131 = vector.load %arg7[%c48_82, %c0_83] : memref<72x256xf32, #tpu.memory_space<vmem>>, vector<8x256xf32>
    tpu.vector_store %arg7[%c48_82, %c0_83], %130 {strides = array<i32>} : memref<72x256xf32, #tpu.memory_space<vmem>>, vector<8x256xf32>,
    %c0_84 = arith.constant 0 : index
    %c144_85 = arith.constant 144 : index
    %132 = vector.load %arg6[%c0_84, %c144_85] : memref<8x512xf32, #tpu.memory_space<vmem>>, vector<8x256xf32>
    %c56_86 = arith.constant 56 : index
    %c0_87 = arith.constant 0 : index
    %133 = vector.load %arg7[%c56_86, %c0_87] : memref<72x256xf32, #tpu.memory_space<vmem>>, vector<8x256xf32>
    tpu.vector_store %arg7[%c56_86, %c0_87], %132 {strides = array<i32>} : memref<72x256xf32, #tpu.memory_space<vmem>>, vector<8x256xf32>,
    %c0_88 = arith.constant 0 : index
    %c145_89 = arith.constant 145 : index
    %134 = vector.load %arg6[%c0_88, %c145_89] : memref<8x512xf32, #tpu.memory_space<vmem>>, vector<8x256xf32>
    %135 = vector.broadcast %43 : vector<1x256xf32> to vector<8x256xf32>
    %136 = arith.mulf %134, %135 : vector<8x256xf32>
    %c64_90 = arith.constant 64 : index
    %c0_91 = arith.constant 0 : index
    %137 = vector.load %arg7[%c64_90, %c0_91] : memref<72x256xf32, #tpu.memory_space<vmem>>, vector<8x256xf32>
    tpu.vector_store %arg7[%c64_90, %c0_91], %136 {strides = array<i32>} : memref<72x256xf32, #tpu.memory_space<vmem>>, vector<8x256xf32>,
    %c1 = arith.constant 1 : index
    %c0_92 = arith.constant 0 : index
    %c0_93 = arith.constant 0 : index
    %138 = vector.load %arg2[%c1, %c0_92, %c0_93] : memref<4x8x72xf32, #tpu.memory_space<vmem>>, vector<1x8x72xf32>
    %139 = vector.shape_cast %138 : vector<1x8x72xf32> to vector<8x72xf32>
    %c0_94 = arith.constant 0 : index
    %c0_95 = arith.constant 0 : index
    %140 = vector.load %arg7[%c0_94, %c0_95] : memref<72x256xf32, #tpu.memory_space<vmem>>, vector<72x256xf32>
    %cst_96 = arith.constant dense<0.000000e+00> : vector<8x256xf32>
    %141 = tpu.matmul %139, %140, %cst_96 {dimension_numbers = #tpu.dot_dimension_numbers<[1], [0], [0], [1], [0, 0, 1, 1], [], []>} : vector<8x72xf32>, vector<72x256xf32>, vector<8x256xf32> -> vector<8x256xf32>
    %cst_97 = arith.constant dense<0.000000e+00> : vector<8xf32>
    %142 = vector.multi_reduction <add>, %141, %cst_97 [1] : vector<8x256xf32> to vector<8xf32>
    %143 = vector.shape_cast %142 : vector<8xf32> to vector<8x1xf32>
    %cst_98 = arith.constant 2.560000e+02 : f32
    %144 = vector.broadcast %cst_98 : f32 to vector<8x1xf32>
    %145 = arith.divf %143, %144 : vector<8x1xf32>
    %146 = vector.broadcast %145 : vector<8x1xf32> to vector<8x256xf32>
    %147 = arith.subf %141, %146 : vector<8x256xf32>
    %148 = arith.mulf %147, %147 : vector<8x256xf32>
    %cst_99 = arith.constant dense<0.000000e+00> : vector<8xf32>
    %149 = vector.multi_reduction <add>, %148, %cst_99 [1] : vector<8x256xf32> to vector<8xf32>
    %150 = vector.shape_cast %149 : vector<8xf32> to vector<8x1xf32>
    %cst_100 = arith.constant 2.560000e+02 : f32
    %151 = vector.broadcast %cst_100 : f32 to vector<8x1xf32>
    %152 = arith.divf %150, %151 : vector<8x1xf32>
    %cst_101 = arith.constant 9.99999974E-6 : f32
    %153 = vector.broadcast %cst_101 : f32 to vector<8x1xf32>
    %154 = arith.addf %152, %153 : vector<8x1xf32>
    %155 = math.rsqrt %154 : vector<8x1xf32>
    %156 = vector.broadcast %155 : vector<8x1xf32> to vector<8x256xf32>
    %157 = arith.mulf %147, %156 : vector<8x256xf32>
    %c1_102 = arith.constant 1 : index
    %c0_103 = arith.constant 0 : index
    %c0_104 = arith.constant 0 : index
    %158 = vector.load %arg3[%c1_102, %c0_103, %c0_104] : memref<4x8x1xf32, #tpu.memory_space<vmem>>, vector<1x8x1xf32>
    %159 = vector.shape_cast %158 : vector<1x8x1xf32> to vector<8x1xf32>
    %160 = vector.broadcast %159 : vector<8x1xf32> to vector<8x256xf32>
    %161 = arith.mulf %157, %160 : vector<8x256xf32>
    %c1_105 = arith.constant 1 : index
    %c0_106 = arith.constant 0 : index
    %c0_107 = arith.constant 0 : index
    %162 = vector.load %arg4[%c1_105, %c0_106, %c0_107] : memref<4x8x1xf32, #tpu.memory_space<vmem>>, vector<1x8x1xf32>
    %163 = vector.shape_cast %162 : vector<1x8x1xf32> to vector<8x1xf32>
    %164 = vector.broadcast %163 : vector<8x1xf32> to vector<8x256xf32>
    %165 = arith.addf %161, %164 : vector<8x256xf32>
    %cst_108 = arith.constant 0.000000e+00 : f32
    %166 = vector.broadcast %cst_108 : f32 to vector<8x256xf32>
    %167 = arith.cmpf oge, %165, %166 : vector<8x256xf32>
    %cst_109 = arith.constant 0.00999999977 : f32
    %168 = vector.broadcast %cst_109 : f32 to vector<8x256xf32>
    %169 = arith.mulf %168, %165 : vector<8x256xf32>
    %170 = arith.select %167, %165, %169 : vector<8x256xi1>, vector<8x256xf32>
    %c0_110 = arith.constant 0 : index
    %c128_111 = arith.constant 128 : index
    %171 = vector.load %arg6[%c0_110, %c128_111] : memref<8x512xf32, #tpu.memory_space<vmem>>, vector<8x256xf32>
    tpu.vector_store %arg6[%c0_110, %c128_111], %170 {strides = array<i32>} : memref<8x512xf32, #tpu.memory_space<vmem>>, vector<8x256xf32>,
    %c0_112 = arith.constant 0 : index
    %c111_113 = arith.constant 111 : index
    %172 = vector.load %arg6[%c0_112, %c111_113] : memref<8x512xf32, #tpu.memory_space<vmem>>, vector<8x256xf32>
    %173 = vector.broadcast %32 : vector<1x256xf32> to vector<8x256xf32>
    %174 = arith.mulf %172, %173 : vector<8x256xf32>
    %c0_114 = arith.constant 0 : index
    %c0_115 = arith.constant 0 : index
    %175 = vector.load %arg7[%c0_114, %c0_115] : memref<72x256xf32, #tpu.memory_space<vmem>>, vector<8x256xf32>
    tpu.vector_store %arg7[%c0_114, %c0_115], %174 {strides = array<i32>} : memref<72x256xf32, #tpu.memory_space<vmem>>, vector<8x256xf32>,
    %c0_116 = arith.constant 0 : index
    %c112_117 = arith.constant 112 : index
    %176 = vector.load %arg6[%c0_116, %c112_117] : memref<8x512xf32, #tpu.memory_space<vmem>>, vector<8x256xf32>
    %c8_118 = arith.constant 8 : index
    %c0_119 = arith.constant 0 : index
    %177 = vector.load %arg7[%c8_118, %c0_119] : memref<72x256xf32, #tpu.memory_space<vmem>>, vector<8x256xf32>
    tpu.vector_store %arg7[%c8_118, %c0_119], %176 {strides = array<i32>} : memref<72x256xf32, #tpu.memory_space<vmem>>, vector<8x256xf32>,
    %c0_120 = arith.constant 0 : index
    %c113_121 = arith.constant 113 : index
    %178 = vector.load %arg6[%c0_120, %c113_121] : memref<8x512xf32, #tpu.memory_space<vmem>>, vector<8x256xf32>
    %179 = vector.broadcast %43 : vector<1x256xf32> to vector<8x256xf32>
    %180 = arith.mulf %178, %179 : vector<8x256xf32>
    %c16_122 = arith.constant 16 : index
    %c0_123 = arith.constant 0 : index
    %181 = vector.load %arg7[%c16_122, %c0_123] : memref<72x256xf32, #tpu.memory_space<vmem>>, vector<8x256xf32>
    tpu.vector_store %arg7[%c16_122, %c0_123], %180 {strides = array<i32>} : memref<72x256xf32, #tpu.memory_space<vmem>>, vector<8x256xf32>,
    %c0_124 = arith.constant 0 : index
    %c127_125 = arith.constant 127 : index
    %182 = vector.load %arg6[%c0_124, %c127_125] : memref<8x512xf32, #tpu.memory_space<vmem>>, vector<8x256xf32>
    %183 = vector.broadcast %32 : vector<1x256xf32> to vector<8x256xf32>
    %184 = arith.mulf %182, %183 : vector<8x256xf32>
    %c24_126 = arith.constant 24 : index
    %c0_127 = arith.constant 0 : index
    %185 = vector.load %arg7[%c24_126, %c0_127] : memref<72x256xf32, #tpu.memory_space<vmem>>, vector<8x256xf32>
    tpu.vector_store %arg7[%c24_126, %c0_127], %184 {strides = array<i32>} : memref<72x256xf32, #tpu.memory_space<vmem>>, vector<8x256xf32>,
    %c0_128 = arith.constant 0 : index
    %c128_129 = arith.constant 128 : index
    %186 = vector.load %arg6[%c0_128, %c128_129] : memref<8x512xf32, #tpu.memory_space<vmem>>, vector<8x256xf32>
    %c32_130 = arith.constant 32 : index
    %c0_131 = arith.constant 0 : index
    %187 = vector.load %arg7[%c32_130, %c0_131] : memref<72x256xf32, #tpu.memory_space<vmem>>, vector<8x256xf32>
    tpu.vector_store %arg7[%c32_130, %c0_131], %186 {strides = array<i32>} : memref<72x256xf32, #tpu.memory_space<vmem>>, vector<8x256xf32>,
    %c0_132 = arith.constant 0 : index
    %c129_133 = arith.constant 129 : index
    %188 = vector.load %arg6[%c0_132, %c129_133] : memref<8x512xf32, #tpu.memory_space<vmem>>, vector<8x256xf32>
    %189 = vector.broadcast %43 : vector<1x256xf32> to vector<8x256xf32>
    %190 = arith.mulf %188, %189 : vector<8x256xf32>
    %c40_134 = arith.constant 40 : index
    %c0_135 = arith.constant 0 : index
    %191 = vector.load %arg7[%c40_134, %c0_135] : memref<72x256xf32, #tpu.memory_space<vmem>>, vector<8x256xf32>
    tpu.vector_store %arg7[%c40_134, %c0_135], %190 {strides = array<i32>} : memref<72x256xf32, #tpu.memory_space<vmem>>, vector<8x256xf32>,
    %c0_136 = arith.constant 0 : index
    %c143_137 = arith.constant 143 : index
    %192 = vector.load %arg6[%c0_136, %c143_137] : memref<8x512xf32, #tpu.memory_space<vmem>>, vector<8x256xf32>
    %193 = vector.broadcast %32 : vector<1x256xf32> to vector<8x256xf32>
    %194 = arith.mulf %192, %193 : vector<8x256xf32>
    %c48_138 = arith.constant 48 : index
    %c0_139 = arith.constant 0 : index
    %195 = vector.load %arg7[%c48_138, %c0_139] : memref<72x256xf32, #tpu.memory_space<vmem>>, vector<8x256xf32>
    tpu.vector_store %arg7[%c48_138, %c0_139], %194 {strides = array<i32>} : memref<72x256xf32, #tpu.memory_space<vmem>>, vector<8x256xf32>,
    %c0_140 = arith.constant 0 : index
    %c144_141 = arith.constant 144 : index
    %196 = vector.load %arg6[%c0_140, %c144_141] : memref<8x512xf32, #tpu.memory_space<vmem>>, vector<8x256xf32>
    %c56_142 = arith.constant 56 : index
    %c0_143 = arith.constant 0 : index
    %197 = vector.load %arg7[%c56_142, %c0_143] : memref<72x256xf32, #tpu.memory_space<vmem>>, vector<8x256xf32>
    tpu.vector_store %arg7[%c56_142, %c0_143], %196 {strides = array<i32>} : memref<72x256xf32, #tpu.memory_space<vmem>>, vector<8x256xf32>,
    %c0_144 = arith.constant 0 : index
    %c145_145 = arith.constant 145 : index
    %198 = vector.load %arg6[%c0_144, %c145_145] : memref<8x512xf32, #tpu.memory_space<vmem>>, vector<8x256xf32>
    %199 = vector.broadcast %43 : vector<1x256xf32> to vector<8x256xf32>
    %200 = arith.mulf %198, %199 : vector<8x256xf32>
    %c64_146 = arith.constant 64 : index
    %c0_147 = arith.constant 0 : index
    %201 = vector.load %arg7[%c64_146, %c0_147] : memref<72x256xf32, #tpu.memory_space<vmem>>, vector<8x256xf32>
    tpu.vector_store %arg7[%c64_146, %c0_147], %200 {strides = array<i32>} : memref<72x256xf32, #tpu.memory_space<vmem>>, vector<8x256xf32>,
    %c2 = arith.constant 2 : index
    %c0_148 = arith.constant 0 : index
    %c0_149 = arith.constant 0 : index
    %202 = vector.load %arg2[%c2, %c0_148, %c0_149] : memref<4x8x72xf32, #tpu.memory_space<vmem>>, vector<1x8x72xf32>
    %203 = vector.shape_cast %202 : vector<1x8x72xf32> to vector<8x72xf32>
    %c0_150 = arith.constant 0 : index
    %c0_151 = arith.constant 0 : index
    %204 = vector.load %arg7[%c0_150, %c0_151] : memref<72x256xf32, #tpu.memory_space<vmem>>, vector<72x256xf32>
    %cst_152 = arith.constant dense<0.000000e+00> : vector<8x256xf32>
    %205 = tpu.matmul %203, %204, %cst_152 {dimension_numbers = #tpu.dot_dimension_numbers<[1], [0], [0], [1], [0, 0, 1, 1], [], []>} : vector<8x72xf32>, vector<72x256xf32>, vector<8x256xf32> -> vector<8x256xf32>
    %cst_153 = arith.constant dense<0.000000e+00> : vector<8xf32>
    %206 = vector.multi_reduction <add>, %205, %cst_153 [1] : vector<8x256xf32> to vector<8xf32>
    %207 = vector.shape_cast %206 : vector<8xf32> to vector<8x1xf32>
    %cst_154 = arith.constant 2.560000e+02 : f32
    %208 = vector.broadcast %cst_154 : f32 to vector<8x1xf32>
    %209 = arith.divf %207, %208 : vector<8x1xf32>
    %210 = vector.broadcast %209 : vector<8x1xf32> to vector<8x256xf32>
    %211 = arith.subf %205, %210 : vector<8x256xf32>
    %212 = arith.mulf %211, %211 : vector<8x256xf32>
    %cst_155 = arith.constant dense<0.000000e+00> : vector<8xf32>
    %213 = vector.multi_reduction <add>, %212, %cst_155 [1] : vector<8x256xf32> to vector<8xf32>
    %214 = vector.shape_cast %213 : vector<8xf32> to vector<8x1xf32>
    %cst_156 = arith.constant 2.560000e+02 : f32
    %215 = vector.broadcast %cst_156 : f32 to vector<8x1xf32>
    %216 = arith.divf %214, %215 : vector<8x1xf32>
    %cst_157 = arith.constant 9.99999974E-6 : f32
    %217 = vector.broadcast %cst_157 : f32 to vector<8x1xf32>
    %218 = arith.addf %216, %217 : vector<8x1xf32>
    %219 = math.rsqrt %218 : vector<8x1xf32>
    %220 = vector.broadcast %219 : vector<8x1xf32> to vector<8x256xf32>
    %221 = arith.mulf %211, %220 : vector<8x256xf32>
    %c2_158 = arith.constant 2 : index
    %c0_159 = arith.constant 0 : index
    %c0_160 = arith.constant 0 : index
    %222 = vector.load %arg3[%c2_158, %c0_159, %c0_160] : memref<4x8x1xf32, #tpu.memory_space<vmem>>, vector<1x8x1xf32>
    %223 = vector.shape_cast %222 : vector<1x8x1xf32> to vector<8x1xf32>
    %224 = vector.broadcast %223 : vector<8x1xf32> to vector<8x256xf32>
    %225 = arith.mulf %221, %224 : vector<8x256xf32>
    %c2_161 = arith.constant 2 : index
    %c0_162 = arith.constant 0 : index
    %c0_163 = arith.constant 0 : index
    %226 = vector.load %arg4[%c2_161, %c0_162, %c0_163] : memref<4x8x1xf32, #tpu.memory_space<vmem>>, vector<1x8x1xf32>
    %227 = vector.shape_cast %226 : vector<1x8x1xf32> to vector<8x1xf32>
    %228 = vector.broadcast %227 : vector<8x1xf32> to vector<8x256xf32>
    %229 = arith.addf %225, %228 : vector<8x256xf32>
    %cst_164 = arith.constant 0.000000e+00 : f32
    %230 = vector.broadcast %cst_164 : f32 to vector<8x256xf32>
    %231 = arith.cmpf oge, %229, %230 : vector<8x256xf32>
    %cst_165 = arith.constant 0.00999999977 : f32
    %232 = vector.broadcast %cst_165 : f32 to vector<8x256xf32>
    %233 = arith.mulf %232, %229 : vector<8x256xf32>
    %234 = arith.select %231, %229, %233 : vector<8x256xi1>, vector<8x256xf32>
    %c0_166 = arith.constant 0 : index
    %c128_167 = arith.constant 128 : index
    %235 = vector.load %arg6[%c0_166, %c128_167] : memref<8x512xf32, #tpu.memory_space<vmem>>, vector<8x256xf32>
    tpu.vector_store %arg6[%c0_166, %c128_167], %234 {strides = array<i32>} : memref<8x512xf32, #tpu.memory_space<vmem>>, vector<8x256xf32>,
    %c0_168 = arith.constant 0 : index
    %c111_169 = arith.constant 111 : index
    %236 = vector.load %arg6[%c0_168, %c111_169] : memref<8x512xf32, #tpu.memory_space<vmem>>, vector<8x256xf32>
    %237 = vector.broadcast %32 : vector<1x256xf32> to vector<8x256xf32>
    %238 = arith.mulf %236, %237 : vector<8x256xf32>
    %c0_170 = arith.constant 0 : index
    %c0_171 = arith.constant 0 : index
    %239 = vector.load %arg7[%c0_170, %c0_171] : memref<72x256xf32, #tpu.memory_space<vmem>>, vector<8x256xf32>
    tpu.vector_store %arg7[%c0_170, %c0_171], %238 {strides = array<i32>} : memref<72x256xf32, #tpu.memory_space<vmem>>, vector<8x256xf32>,
    %c0_172 = arith.constant 0 : index
    %c112_173 = arith.constant 112 : index
    %240 = vector.load %arg6[%c0_172, %c112_173] : memref<8x512xf32, #tpu.memory_space<vmem>>, vector<8x256xf32>
    %c8_174 = arith.constant 8 : index
    %c0_175 = arith.constant 0 : index
    %241 = vector.load %arg7[%c8_174, %c0_175] : memref<72x256xf32, #tpu.memory_space<vmem>>, vector<8x256xf32>
    tpu.vector_store %arg7[%c8_174, %c0_175], %240 {strides = array<i32>} : memref<72x256xf32, #tpu.memory_space<vmem>>, vector<8x256xf32>,
    %c0_176 = arith.constant 0 : index
    %c113_177 = arith.constant 113 : index
    %242 = vector.load %arg6[%c0_176, %c113_177] : memref<8x512xf32, #tpu.memory_space<vmem>>, vector<8x256xf32>
    %243 = vector.broadcast %43 : vector<1x256xf32> to vector<8x256xf32>
    %244 = arith.mulf %242, %243 : vector<8x256xf32>
    %c16_178 = arith.constant 16 : index
    %c0_179 = arith.constant 0 : index
    %245 = vector.load %arg7[%c16_178, %c0_179] : memref<72x256xf32, #tpu.memory_space<vmem>>, vector<8x256xf32>
    tpu.vector_store %arg7[%c16_178, %c0_179], %244 {strides = array<i32>} : memref<72x256xf32, #tpu.memory_space<vmem>>, vector<8x256xf32>,
    %c0_180 = arith.constant 0 : index
    %c127_181 = arith.constant 127 : index
    %246 = vector.load %arg6[%c0_180, %c127_181] : memref<8x512xf32, #tpu.memory_space<vmem>>, vector<8x256xf32>
    %247 = vector.broadcast %32 : vector<1x256xf32> to vector<8x256xf32>
    %248 = arith.mulf %246, %247 : vector<8x256xf32>
    %c24_182 = arith.constant 24 : index
    %c0_183 = arith.constant 0 : index
    %249 = vector.load %arg7[%c24_182, %c0_183] : memref<72x256xf32, #tpu.memory_space<vmem>>, vector<8x256xf32>
    tpu.vector_store %arg7[%c24_182, %c0_183], %248 {strides = array<i32>} : memref<72x256xf32, #tpu.memory_space<vmem>>, vector<8x256xf32>,
    %c0_184 = arith.constant 0 : index
    %c128_185 = arith.constant 128 : index
    %250 = vector.load %arg6[%c0_184, %c128_185] : memref<8x512xf32, #tpu.memory_space<vmem>>, vector<8x256xf32>
    %c32_186 = arith.constant 32 : index
    %c0_187 = arith.constant 0 : index
    %251 = vector.load %arg7[%c32_186, %c0_187] : memref<72x256xf32, #tpu.memory_space<vmem>>, vector<8x256xf32>
    tpu.vector_store %arg7[%c32_186, %c0_187], %250 {strides = array<i32>} : memref<72x256xf32, #tpu.memory_space<vmem>>, vector<8x256xf32>,
    %c0_188 = arith.constant 0 : index
    %c129_189 = arith.constant 129 : index
    %252 = vector.load %arg6[%c0_188, %c129_189] : memref<8x512xf32, #tpu.memory_space<vmem>>, vector<8x256xf32>
    %253 = vector.broadcast %43 : vector<1x256xf32> to vector<8x256xf32>
    %254 = arith.mulf %252, %253 : vector<8x256xf32>
    %c40_190 = arith.constant 40 : index
    %c0_191 = arith.constant 0 : index
    %255 = vector.load %arg7[%c40_190, %c0_191] : memref<72x256xf32, #tpu.memory_space<vmem>>, vector<8x256xf32>
    tpu.vector_store %arg7[%c40_190, %c0_191], %254 {strides = array<i32>} : memref<72x256xf32, #tpu.memory_space<vmem>>, vector<8x256xf32>,
    %c0_192 = arith.constant 0 : index
    %c143_193 = arith.constant 143 : index
    %256 = vector.load %arg6[%c0_192, %c143_193] : memref<8x512xf32, #tpu.memory_space<vmem>>, vector<8x256xf32>
    %257 = vector.broadcast %32 : vector<1x256xf32> to vector<8x256xf32>
    %258 = arith.mulf %256, %257 : vector<8x256xf32>
    %c48_194 = arith.constant 48 : index
    %c0_195 = arith.constant 0 : index
    %259 = vector.load %arg7[%c48_194, %c0_195] : memref<72x256xf32, #tpu.memory_space<vmem>>, vector<8x256xf32>
    tpu.vector_store %arg7[%c48_194, %c0_195], %258 {strides = array<i32>} : memref<72x256xf32, #tpu.memory_space<vmem>>, vector<8x256xf32>,
    %c0_196 = arith.constant 0 : index
    %c144_197 = arith.constant 144 : index
    %260 = vector.load %arg6[%c0_196, %c144_197] : memref<8x512xf32, #tpu.memory_space<vmem>>, vector<8x256xf32>
    %c56_198 = arith.constant 56 : index
    %c0_199 = arith.constant 0 : index
    %261 = vector.load %arg7[%c56_198, %c0_199] : memref<72x256xf32, #tpu.memory_space<vmem>>, vector<8x256xf32>
    tpu.vector_store %arg7[%c56_198, %c0_199], %260 {strides = array<i32>} : memref<72x256xf32, #tpu.memory_space<vmem>>, vector<8x256xf32>,
    %c0_200 = arith.constant 0 : index
    %c145_201 = arith.constant 145 : index
    %262 = vector.load %arg6[%c0_200, %c145_201] : memref<8x512xf32, #tpu.memory_space<vmem>>, vector<8x256xf32>
    %263 = vector.broadcast %43 : vector<1x256xf32> to vector<8x256xf32>
    %264 = arith.mulf %262, %263 : vector<8x256xf32>
    %c64_202 = arith.constant 64 : index
    %c0_203 = arith.constant 0 : index
    %265 = vector.load %arg7[%c64_202, %c0_203] : memref<72x256xf32, #tpu.memory_space<vmem>>, vector<8x256xf32>
    tpu.vector_store %arg7[%c64_202, %c0_203], %264 {strides = array<i32>} : memref<72x256xf32, #tpu.memory_space<vmem>>, vector<8x256xf32>,
    %c3 = arith.constant 3 : index
    %c0_204 = arith.constant 0 : index
    %c0_205 = arith.constant 0 : index
    %266 = vector.load %arg2[%c3, %c0_204, %c0_205] : memref<4x8x72xf32, #tpu.memory_space<vmem>>, vector<1x8x72xf32>
    %267 = vector.shape_cast %266 : vector<1x8x72xf32> to vector<8x72xf32>
    %c0_206 = arith.constant 0 : index
    %c0_207 = arith.constant 0 : index
    %268 = vector.load %arg7[%c0_206, %c0_207] : memref<72x256xf32, #tpu.memory_space<vmem>>, vector<72x256xf32>
    %cst_208 = arith.constant dense<0.000000e+00> : vector<8x256xf32>
    %269 = tpu.matmul %267, %268, %cst_208 {dimension_numbers = #tpu.dot_dimension_numbers<[1], [0], [0], [1], [0, 0, 1, 1], [], []>} : vector<8x72xf32>, vector<72x256xf32>, vector<8x256xf32> -> vector<8x256xf32>
    %cst_209 = arith.constant dense<0.000000e+00> : vector<8xf32>
    %270 = vector.multi_reduction <add>, %269, %cst_209 [1] : vector<8x256xf32> to vector<8xf32>
    %271 = vector.shape_cast %270 : vector<8xf32> to vector<8x1xf32>
    %cst_210 = arith.constant 2.560000e+02 : f32
    %272 = vector.broadcast %cst_210 : f32 to vector<8x1xf32>
    %273 = arith.divf %271, %272 : vector<8x1xf32>
    %274 = vector.broadcast %273 : vector<8x1xf32> to vector<8x256xf32>
    %275 = arith.subf %269, %274 : vector<8x256xf32>
    %276 = arith.mulf %275, %275 : vector<8x256xf32>
    %cst_211 = arith.constant dense<0.000000e+00> : vector<8xf32>
    %277 = vector.multi_reduction <add>, %276, %cst_211 [1] : vector<8x256xf32> to vector<8xf32>
    %278 = vector.shape_cast %277 : vector<8xf32> to vector<8x1xf32>
    %cst_212 = arith.constant 2.560000e+02 : f32
    %279 = vector.broadcast %cst_212 : f32 to vector<8x1xf32>
    %280 = arith.divf %278, %279 : vector<8x1xf32>
    %cst_213 = arith.constant 9.99999974E-6 : f32
    %281 = vector.broadcast %cst_213 : f32 to vector<8x1xf32>
    %282 = arith.addf %280, %281 : vector<8x1xf32>
    %283 = math.rsqrt %282 : vector<8x1xf32>
    %284 = vector.broadcast %283 : vector<8x1xf32> to vector<8x256xf32>
    %285 = arith.mulf %275, %284 : vector<8x256xf32>
    %c3_214 = arith.constant 3 : index
    %c0_215 = arith.constant 0 : index
    %c0_216 = arith.constant 0 : index
    %286 = vector.load %arg3[%c3_214, %c0_215, %c0_216] : memref<4x8x1xf32, #tpu.memory_space<vmem>>, vector<1x8x1xf32>
    %287 = vector.shape_cast %286 : vector<1x8x1xf32> to vector<8x1xf32>
    %288 = vector.broadcast %287 : vector<8x1xf32> to vector<8x256xf32>
    %289 = arith.mulf %285, %288 : vector<8x256xf32>
    %c3_217 = arith.constant 3 : index
    %c0_218 = arith.constant 0 : index
    %c0_219 = arith.constant 0 : index
    %290 = vector.load %arg4[%c3_217, %c0_218, %c0_219] : memref<4x8x1xf32, #tpu.memory_space<vmem>>, vector<1x8x1xf32>
    %291 = vector.shape_cast %290 : vector<1x8x1xf32> to vector<8x1xf32>
    %292 = vector.broadcast %291 : vector<8x1xf32> to vector<8x256xf32>
    %293 = arith.addf %289, %292 : vector<8x256xf32>
    %cst_220 = arith.constant 0.000000e+00 : f32
    %294 = vector.broadcast %cst_220 : f32 to vector<8x256xf32>
    %295 = arith.cmpf oge, %293, %294 : vector<8x256xf32>
    %cst_221 = arith.constant 0.00999999977 : f32
    %296 = vector.broadcast %cst_221 : f32 to vector<8x256xf32>
    %297 = arith.mulf %296, %293 : vector<8x256xf32>
    %298 = arith.select %295, %293, %297 : vector<8x256xi1>, vector<8x256xf32>
    %c0_222 = arith.constant 0 : index
    %c0_223 = arith.constant 0 : index
    %c0_224 = arith.constant 0 : index
    %299 = vector.load %arg5[%c0_222, %c0_223, %c0_224] : memref<1x8x256xf32, #tpu.memory_space<vmem>>, vector<1x8x256xf32>
    %300 = vector.shape_cast %299 : vector<1x8x256xf32> to vector<8x256xf32>
    %301 = vector.shape_cast %298 : vector<8x256xf32> to vector<1x8x256xf32>
    tpu.vector_store %arg5[%c0_222, %c0_223, %c0_224], %301 {strides = array<i32>} : memref<1x8x256xf32, #tpu.memory_space<vmem>>, vector<1x8x256xf32>,
    return
  }
  func.func @transform_0(%arg0: i32) -> (i32, i32, i32) {
    %c0_i32 = arith.constant 0 : i32
    %c0_i32_0 = arith.constant 0 : i32
    %c0_i32_1 = arith.constant 0 : i32
    return %arg0, %c0_i32, %c0_i32_0 : i32, i32, i32
  }
  func.func @transform_1(%arg0: i32) -> (i32, i32, i32) {
    %c0_i32 = arith.constant 0 : i32
    %c0_i32_0 = arith.constant 0 : i32
    %c0_i32_1 = arith.constant 0 : i32
    %c0_i32_2 = arith.constant 0 : i32
    return %c0_i32, %c0_i32_0, %c0_i32_1 : i32, i32, i32
  }
  func.func @transform_2(%arg0: i32) -> (i32, i32, i32) {
    %c0_i32 = arith.constant 0 : i32
    %c0_i32_0 = arith.constant 0 : i32
    %c0_i32_1 = arith.constant 0 : i32
    %c0_i32_2 = arith.constant 0 : i32
    return %c0_i32, %c0_i32_0, %c0_i32_1 : i32, i32, i32
  }
  func.func @transform_3(%arg0: i32) -> (i32, i32, i32) {
    %c0_i32 = arith.constant 0 : i32
    %c0_i32_0 = arith.constant 0 : i32
    %c0_i32_1 = arith.constant 0 : i32
    %c0_i32_2 = arith.constant 0 : i32
    return %c0_i32, %c0_i32_0, %c0_i32_1 : i32, i32, i32
  }
  func.func @transform_4(%arg0: i32) -> (i32, i32, i32) {
    %c0_i32 = arith.constant 0 : i32
    %c0_i32_0 = arith.constant 0 : i32
    %c0_i32_1 = arith.constant 0 : i32
    return %arg0, %c0_i32, %c0_i32_0 : i32, i32, i32
  }
}

</mosaic_0001>

<llo_original>
// kernel: unet_stacked_block_forward.1
$region0: #{unet_stacked_block_forward.1}
  #allocation0 [shape = 'u32[]', space=smem, size = 0x4, offset = 0x4, fixed_abs, tag = 'smem constant byte address 0x4 - core index']
  #allocation1 [shape = 'u32[144,128]{1,0:T(1,128)}', space=vmem, size = 0x12000, scoped, tag = 'internal scratch']
  #allocation2 [shape = 'f32[8,512]{1,0:T(8,128)}', space=vmem, size = 0x4000, scoped, tag = 'scratch operand']
  #allocation3 [shape = 'f32[72,256]{1,0:T(8,128)}', space=vmem, size = 0x12000, scoped, tag = 'scratch operand']
  %s0 = inlined_call_operand.vmem [shape: f32[2,4,256], index: 0, kind: input, shape index: {}]
  %s1 = inlined_call_operand.vmem [shape: f32[4,8,72], index: 1, kind: input, shape index: {}]
  %s2 = inlined_call_operand.vmem [shape: f32[4,8,1], index: 2, kind: input, shape index: {}]
  %s3 = inlined_call_operand.vmem [shape: f32[4,8,1], index: 3, kind: input, shape index: {}]
  %s4 = inlined_call_operand.vmem [shape: f32[2,8,256], index: 4, kind: output, shape index: {}]
  %s5 = sld [smem:[#allocation0]]
  $region49: #{unet_stacked_block_forward.1} parent=0
    _
  %s7 = ssub.s32 1, %s5
  %s8 = scalar_select 0, %s7, %s5
  loop: start=0, step=1, limit=4
  $region2: #{unet_stacked_block_forward.1} parent=0 // loop_pre_header
    _
  $region3: #{unet_stacked_block_forward.1} parent=0 // loop_header
    %s10 = sphi 0, %s14
    %p11 = scmp.ge.s32.totalorder %s10, 4
    %s20 = sphi 0, %s22
    %s23 = sphi 0, %s20
    %s24 = sphi 0, %s23
    %s40 = sphi 0, %s24
    %s44 = sphi 0, %s44
    %s46 = sphi 0, %s44
    %s47 = sphi 0, %s46
    %s61 = sphi 0, %s47
    %s65 = sphi 0, %s65
    %s67 = sphi 0, %s65
    %s68 = sphi 0, %s67
    %s82 = sphi 0, %s68
    %s86 = sphi 0, %s86
    %s88 = sphi 0, %s86
    %s89 = sphi 0, %s88
    %s103 = sphi 0, %s89
    %s109 = sphi 0, %s111
    %s112 = sphi 0, %s109
    %s113 = sphi 0, %s112
    %s129 = sphi 0, %s113
  $region4: #{unet_stacked_block_forward.1} parent=0 // loop_header_branch
    %13 = sbr.rel (%p11) target = $region8
  $region5: #{unet_stacked_block_forward.1} parent=0 // loop_body
    %s15 = ssub.s32 %s10, 1
    %s16 = ssub.s32 %s10, 2
    %s17 = sadd.s32 %s10, 1
    %s18 = ssub.s32 %s10, %s17
    %p19 = scmp.eq.s32.totalorder %s18, 0
    %s21 = sadd.s32 %s20, 1
    %s22 = scalar_select %p19, %s20, %s21
    %p25 = pneg %p19
    %p26 = scmp.eq.s32.totalorder %s10, 1
    %p27 = por %p25, %p26
    %p28 = scmp.ne.s32.totalorder %s20, %s23
    %p29 = scmp.eq.s32.totalorder %s10, 0
    %p30 = por %p28, %p29
    %p31 = scmp.ne.s32.totalorder %s20, %s23
    %p32 = scmp.eq.s32.totalorder %s15, 1
    %p33 = por %p31, %p32
    %p34 = scmp.ne.s32.totalorder %s23, %s24
    %p35 = scmp.eq.s32.totalorder %s15, 0
    %p36 = por %p34, %p35
    %p37 = scmp.ne.s32.totalorder %s23, %s24
    %p38 = scmp.eq.s32.totalorder %s16, 1
    %p39 = por %p37, %p38
    %p41 = scmp.ne.s32.totalorder %s24, %s40
    %p42 = scmp.eq.s32.totalorder %s16, 0
    %p43 = por %p41, %p42
    %s45 = sadd.s32 %s44, 1
    %p48 = scmp.eq.s32.totalorder %s10, 1
    %p49 = scmp.ne.s32.totalorder %s44, %s46
    %p50 = scmp.eq.s32.totalorder %s10, 0
    %p51 = por %p49, %p50
    %p52 = scmp.ne.s32.totalorder %s44, %s46
    %p53 = scmp.eq.s32.totalorder %s15, 1
    %p54 = por %p52, %p53
    %p55 = scmp.ne.s32.totalorder %s46, %s47
    %p56 = scmp.eq.s32.totalorder %s15, 0
    %p57 = por %p55, %p56
    %p58 = scmp.ne.s32.totalorder %s46, %s47
    %p59 = scmp.eq.s32.totalorder %s16, 1
    %p60 = por %p58, %p59
    %p62 = scmp.ne.s32.totalorder %s47, %s61
    %p63 = scmp.eq.s32.totalorder %s16, 0
    %p64 = por %p62, %p63
    %s66 = sadd.s32 %s65, 1
    %p69 = scmp.eq.s32.totalorder %s10, 1
    %p70 = scmp.ne.s32.totalorder %s65, %s67
    %p71 = scmp.eq.s32.totalorder %s10, 0
    %p72 = por %p70, %p71
    %p73 = scmp.ne.s32.totalorder %s65, %s67
    %p74 = scmp.eq.s32.totalorder %s15, 1
    %p75 = por %p73, %p74
    %p76 = scmp.ne.s32.totalorder %s67, %s68
    %p77 = scmp.eq.s32.totalorder %s15, 0
    %p78 = por %p76, %p77
    %p79 = scmp.ne.s32.totalorder %s67, %s68
    %p80 = scmp.eq.s32.totalorder %s16, 1
    %p81 = por %p79, %p80
    %p83 = scmp.ne.s32.totalorder %s68, %s82
    %p84 = scmp.eq.s32.totalorder %s16, 0
    %p85 = por %p83, %p84
    %s87 = sadd.s32 %s86, 1
    %p90 = scmp.eq.s32.totalorder %s10, 1
    %p91 = scmp.ne.s32.totalorder %s86, %s88
    %p92 = scmp.eq.s32.totalorder %s10, 0
    %p93 = por %p91, %p92
    %p94 = scmp.ne.s32.totalorder %s86, %s88
    %p95 = scmp.eq.s32.totalorder %s15, 1
    %p96 = por %p94, %p95
    %p97 = scmp.ne.s32.totalorder %s88, %s89
    %p98 = scmp.eq.s32.totalorder %s15, 0
    %p99 = por %p97, %p98
    %p100 = scmp.ne.s32.totalorder %s88, %s89
    %p101 = scmp.eq.s32.totalorder %s16, 1
    %p102 = por %p100, %p101
    %p104 = scmp.ne.s32.totalorder %s89, %s103
    %p105 = scmp.eq.s32.totalorder %s16, 0
    %p106 = por %p104, %p105
    %s107 = ssub.s32 %s10, %s17
    %p108 = scmp.eq.s32.totalorder %s107, 0
    %s110 = sadd.s32 %s109, 1
    %s111 = scalar_select %p108, %s109, %s110
    %p114 = pneg %p108
    %p115 = scmp.eq.s32.totalorder %s10, 1
    %p116 = por %p114, %p115
    %p117 = scmp.ne.s32.totalorder %s109, %s112
    %p118 = scmp.eq.s32.totalorder %s10, 0
    %p119 = por %p117, %p118
    %p120 = scmp.ne.s32.totalorder %s109, %s112
    %p121 = scmp.eq.s32.totalorder %s15, 1
    %p122 = por %p120, %p121
    %p123 = scmp.ne.s32.totalorder %s112, %s113
    %p124 = scmp.eq.s32.totalorder %s15, 0
    %p125 = por %p123, %p124
    %p126 = scmp.ne.s32.totalorder %s112, %s113
    %p127 = scmp.eq.s32.totalorder %s16, 1
    %p128 = por %p126, %p127
    %p130 = scmp.ne.s32.totalorder %s113, %s129
    %p131 = scmp.eq.s32.totalorder %s16, 0
    %p132 = por %p130, %p131
    %p133 = scmp.le.s32.totalorder 1, %s10
    %p134 = scmp.lt.s32.totalorder %s10, 3
    %p135 = pnand %p133, %p134
    %p136 = pneg %p135
    // Predicated region
    $region9: #{unet_stacked_block_forward.1} parent=5 // pred_check
      _
    $region10: #{unet_stacked_block_forward.1} parent=5 // pred_check_branch
      %138 = sbr.rel (%p135) target = $region12
    $region11: #{unet_stacked_block_forward.1} parent=5 // pred_region
      %s139 = ssub.s32 %s10, 1
      // Predicated region
      $region13: #{unet_stacked_block_forward.1} parent=11 // pred_check
        %p140 = pneg %p57
      $region14: #{unet_stacked_block_forward.1} parent=11 // pred_check_branch
        %142 = sbr.rel (%p140) target = $region16
      $region15: #{unet_stacked_block_forward.1} parent=11 // pred_region
        _
      $region16: #{unet_stacked_block_forward.1} parent=11 // pred_fallthru
        _
      // Predicated region
      $region17: #{unet_stacked_block_forward.1} parent=11 // pred_check
        %p143 = pneg %p78
      $region18: #{unet_stacked_block_forward.1} parent=11 // pred_check_branch
        %145 = sbr.rel (%p143) target = $region20
      $region19: #{unet_stacked_block_forward.1} parent=11 // pred_region
        _
      $region20: #{unet_stacked_block_forward.1} parent=11 // pred_fallthru
        _
      // Predicated region
      $region21: #{unet_stacked_block_forward.1} parent=11 // pred_check
        %p146 = pneg %p99
      $region22: #{unet_stacked_block_forward.1} parent=11 // pred_check_branch
        %148 = sbr.rel (%p146) target = $region24
      $region23: #{unet_stacked_block_forward.1} parent=11 // pred_region
        _
      $region24: #{unet_stacked_block_forward.1} parent=11 // pred_fallthru
        _
    $region12: #{unet_stacked_block_forward.1} parent=5 // pred_fallthru
      _
    %p149 = scmp.lt.s32.totalorder %s10, 2
    // Predicated region
    $region25: #{unet_stacked_block_forward.1} parent=5 // pred_check
      %p150 = pneg %p149
    $region26: #{unet_stacked_block_forward.1} parent=5 // pred_check_branch
      %152 = sbr.rel (%p150) target = $region28
    $region27: #{unet_stacked_block_forward.1} parent=5 // pred_region
      // Predicated region
      $region29: #{unet_stacked_block_forward.1} parent=27 // pred_check
        %p153 = pneg %p30
      $region30: #{unet_stacked_block_forward.1} parent=27 // pred_check_branch
        %155 = sbr.rel (%p153) target = $region32
      $region31: #{unet_stacked_block_forward.1} parent=27 // pred_region
        %p156 = scmp.lt.s32.totalorder %s10, 1
        %s157 = scalar_select %p156, %s10, 1
        %s158 = smul.addr %s157, 2
        %s159 = smul.addr %s158, 4
        %s160 = scalar_lea.vmem %s0, %s159
      $region32: #{unet_stacked_block_forward.1} parent=27 // pred_fallthru
        _
    $region28: #{unet_stacked_block_forward.1} parent=5 // pred_fallthru
      _
    %p161 = scmp.le.s32.totalorder 1, %s10
    %p162 = scmp.lt.s32.totalorder %s10, 3
    %p163 = pnand %p161, %p162
    %p164 = pneg %p163
    // Predicated region
    $region33: #{unet_stacked_block_forward.1} parent=5 // pred_check
      _
    $region34: #{unet_stacked_block_forward.1} parent=5 // pred_check_branch
      %166 = sbr.rel (%p163) target = $region36
    $region35: #{unet_stacked_block_forward.1} parent=5 // pred_region
      %s167 = ssub.s32 %s10, 1
      %p168 = scmp.lt.s32.totalorder %s15, 1
      %s169 = scalar_select %p168, %s15, 1
      %s170 = smul.addr %s169, 2
      %s171 = smul.addr %s170, 4
      %s172 = scalar_lea.vmem %s0, %s171
      %p173 = pneg %p36
      %p174 = pneg %p33
      %p175 = pneg %p57
      %p176 = pneg %p54
      %p177 = pneg %p78
      %p178 = pneg %p75
      %p179 = pneg %p99
      %p180 = pneg %p96
      %p181 = pneg %p125
      %p182 = pneg %p122
      %p183 = scmp.lt.s32.totalorder %s15, 1
      %s184 = scalar_select %p183, %s15, 1
      %s185 = smul.addr %s184, 2
      %s186 = smul.addr %s185, 8
      %s187 = scalar_lea.vmem %s4, %s186
      %p188 = scmp.lt.s32.totalorder %s15, 1
      %s189 = scalar_select %p188, %s15, 1
      %s190 = smul.addr %s189, 2
      %s191 = smul.addr %s190, 4
      %s192 = scalar_lea.vmem %s0, %s191
      %p193 = scmp.lt.s32.totalorder %s15, 1
      %s194 = scalar_select %p193, %s15, 1
      %s195 = smul.addr %s194, 2
      %s196 = smul.addr %s195, 8
      %s197 = scalar_lea.vmem %s4, %s196
      %198 = vst [vmem:[#allocation2] sm:$0xff] 0.0
      %199 = vst [vmem:[#allocation2 + $0x8] sm:$0xff] 0.0
      %200 = vst [vmem:[#allocation2 + $0x10] sm:$0xff] 0.0
      %201 = vst [vmem:[#allocation2 + $0x18] sm:$0xff] 0.0
      %v202 = vld [vmem:[%s192] sm:$0xff]
      %v204 = vcombine.high %v202, %v202
      %206 = vst [vmem:[#allocation2 + $0x8] sm:$0xf] %v202
      %207 = vst [vmem:[#allocation2 + $0x10] sm:$0xf] %v204
      %v208 = vlaneseq
      %v209 = vand.u32 %v208, 127
      %v210 = vadd.s32 %v209, 128
      %vm211 = vcmp.lt.s32.totalorder %v209, 0
      %v212 = vsub.s32 0, %v209
      %v213 = vsel %vm211, %v212, %v209
      %v214 = vshrl.u32 %v213, 4
      %v215 = vand.u32 %v213, 15
      %v216 = vsub.s32 0, %v215
      %v217 = vsel %vm211, %v216, %v215
      %vm218 = vcmp.lt.s32.totalorder %v210, 0
      %v219 = vsub.s32 0, %v210
      %v220 = vsel %vm218, %v219, %v210
      %v221 = vshrl.u32 %v220, 4
      %v222 = vand.u32 %v220, 15
      %v223 = vsub.s32 0, %v222
      %v224 = vsel %vm218, %v223, %v222
      %vm225 = vcmp.ne.s32.totalorder %v217, 0
      %vm226 = vcmp.ne.s32.totalorder %v224, 0
      %vm227 = vcmp.lt.s32.totalorder %v217, 0
      %vm228 = vcmp.lt.s32.totalorder %v224, 0
      %vm229 = vmand %vm227, %vm225
      %vm230 = vmand %vm228, %vm226
      %v231 = vadd.s32 %v217, 16
      %v232 = vadd.s32 %v224, 16
      %v233 = vsel %vm229, %v231, %v217
      %v234 = vsel %vm230, %v232, %v224
      %v235 = vadd.s32 %v233, 4294967295
      %v236 = vadd.s32 %v234, 4294967295
      %vm237 = vcmp.ge.s32.totalorder %v235, 0
      %vm238 = vcmp.ge.s32.totalorder %v236, 0
      %vm239 = vcmp.lt.s32.totalorder %v235, 16
      %vm240 = vcmp.lt.s32.totalorder %v236, 16
      %vm241 = vmand %vm237, %vm239
      %vm242 = vmand %vm238, %vm240
      %v243 = vsel %vm241, 1, 0
      %v244 = vsel %vm242, 1, 0
      %v245 = vcvt.s32.f32 %v243
      %v246 = vcvt.s32.f32 %v244
      %v247 = vadd.s32 %v233, 1
      %v248 = vadd.s32 %v234, 1
      %vm249 = vcmp.ge.s32.totalorder %v247, 0
      %vm250 = vcmp.ge.s32.totalorder %v248, 0
      %vm251 = vcmp.lt.s32.totalorder %v247, 16
      %vm252 = vcmp.lt.s32.totalorder %v248, 16
      %vm253 = vmand %vm249, %vm251
      %vm254 = vmand %vm250, %vm252
      %v255 = vsel %vm253, 1, 0
      %v256 = vsel %vm254, 1, 0
      %v257 = vcvt.s32.f32 %v255
      %v258 = vcvt.s32.f32 %v256
      %v259 = vld [vmem:[#allocation2] sm:$0xff]
      %v260 = vld [vmem:[#allocation2 + $0x8] sm:$0xff]
      %v261 = vld [vmem:[#allocation2 + $0x10] sm:$0xff]
      %264 = vrot.lane.b32.xlu0 %v245, 111
      %v265 = vpop.permute.xlu0 %264
      %266 = vrot.lane.b32.xlu0 %v246, 111
      %v267 = vpop.permute.xlu0 %266
      %vm268 = vcmask 908288
      %v269 = vsel %vm268, %v265, %v267
      %v273 = vmul.f32 %v259, %v265
      %v274 = vmul.f32 %v260, %v269
      %v275 = vmul.f32 %v261, %v267
      %279 = vrot.lane.b32.xlu0 %v273, 17
      %v280 = vpop.permute.xlu0 %279
      %281 = vrot.lane.b32.xlu0 %v274, 17
      %v282 = vpop.permute.xlu0 %281
      %283 = vrot.lane.b32.xlu0 %v275, 17
      %v284 = vpop.permute.xlu0 %283
      %vm285 = vcmask 138240
      %v286 = vsel %vm285, %v280, %v282
      %v287 = vsel %vm285, %v282, %v284
      %290 = vst [vmem:[#allocation3] sm:$0xff] %v286
      %291 = vst [vmem:[#allocation3 + $0x8] sm:$0xff] %v287
      %v292 = vld [vmem:[#allocation2] sm:$0xff]
      %v293 = vld [vmem:[#allocation2 + $0x8] sm:$0xff]
      %v294 = vld [vmem:[#allocation2 + $0x10] sm:$0xff]
      %298 = vrot.lane.b32.xlu0 %v292, 16
      %v299 = vpop.permute.xlu0 %298
      %300 = vrot.lane.b32.xlu0 %v293, 16
      %v301 = vpop.permute.xlu0 %300
      %302 = vrot.lane.b32.xlu0 %v294, 16
      %v303 = vpop.permute.xlu0 %302
      %vm304 = vcmask 130048
      %v305 = vsel %vm304, %v299, %v301
      %v306 = vsel %vm304, %v301, %v303
      %309 = vst [vmem:[#allocation3 + $0x10] sm:$0xff] %v305
      %310 = vst [vmem:[#allocation3 + $0x18] sm:$0xff] %v306
      %v311 = vld [vmem:[#allocation2] sm:$0xff]
      %v312 = vld [vmem:[#allocation2 + $0x8] sm:$0xff]
      %v313 = vld [vmem:[#allocation2 + $0x10] sm:$0xff]
      %316 = vrot.lane.b32.xlu0 %v257, 113
      %v317 = vpop.permute.xlu0 %316
      %318 = vrot.lane.b32.xlu0 %v258, 113
      %v319 = vpop.permute.xlu0 %318
      %vm320 = vcmask 924672
      %v321 = vsel %vm320, %v317, %v319
      %v325 = vmul.f32 %v311, %v317
      %v326 = vmul.f32 %v312, %v321
      %v327 = vmul.f32 %v313, %v319
      %331 = vrot.lane.b32.xlu0 %v325, 15
      %v332 = vpop.permute.xlu0 %331
      %333 = vrot.lane.b32.xlu0 %v326, 15
      %v334 = vpop.permute.xlu0 %333
      %335 = vrot.lane.b32.xlu0 %v327, 15
      %v336 = vpop.permute.xlu0 %335
      %vm337 = vcmask 121856
      %v338 = vsel %vm337, %v332, %v334
      %v339 = vsel %vm337, %v334, %v336
      %342 = vst [vmem:[#allocation3 + $0x20] sm:$0xff] %v338
      %343 = vst [vmem:[#allocation3 + $0x28] sm:$0xff] %v339
      %v344 = vld [vmem:[#allocation2] sm:$0xff]
      %v345 = vld [vmem:[#allocation2 + $0x8] sm:$0xff]
      %v346 = vld [vmem:[#allocation2 + $0x10] sm:$0xff]
      %347 = vrot.lane.b32.xlu0 %v245, 127
      %v348 = vpop.permute.xlu0 %347
      %349 = vrot.lane.b32.xlu0 %v246, 127
      %v350 = vpop.permute.xlu0 %349
      %vm351 = vcmask 1039360
      %v352 = vsel %vm351, %v348, %v350
      %v356 = vmul.f32 %v344, %v348
      %v357 = vmul.f32 %v345, %v352
      %v358 = vmul.f32 %v346, %v350
      %362 = vrot.lane.b32.xlu0 %v356, 1
      %v363 = vpop.permute.xlu0 %362
      %364 = vrot.lane.b32.xlu0 %v357, 1
      %v365 = vpop.permute.xlu0 %364
      %366 = vrot.lane.b32.xlu0 %v358, 1
      %v367 = vpop.permute.xlu0 %366
      %vm368 = vcmask 7168
      %v369 = vsel %vm368, %v363, %v365
      %v370 = vsel %vm368, %v365, %v367
      %373 = vst [vmem:[#allocation3 + $0x30] sm:$0xff] %v369
      %374 = vst [vmem:[#allocation3 + $0x38] sm:$0xff] %v370
      %v375 = vld [vmem:[#allocation2 + $0x8] sm:$0xff]
      %v376 = vld [vmem:[#allocation2 + $0x10] sm:$0xff]
      %377 = vst [vmem:[#allocation3 + $0x40] sm:$0xff] %v375
      %378 = vst [vmem:[#allocation3 + $0x48] sm:$0xff] %v376
      %v379 = vld [vmem:[#allocation2 + $0x8] sm:$0xff]
      %v380 = vld [vmem:[#allocation2 + $0x10] sm:$0xff]
      %v381 = vld [vmem:[#allocation2 + $0x18] sm:$0xff]
      %382 = vrot.lane.b32.xlu0 %v257, 1
      %v383 = vpop.permute.xlu0 %382
      %384 = vrot.lane.b32.xlu0 %v258, 1
      %v385 = vpop.permute.xlu0 %384
      %v386 = vsel %vm368, %v383, %v385
      %v390 = vmul.f32 %v379, %v383
      %v391 = vmul.f32 %v380, %v386
      %v392 = vmul.f32 %v381, %v385
      %396 = vrot.lane.b32.xlu0 %v390, 127
      %v397 = vpop.permute.xlu0 %396
      %398 = vrot.lane.b32.xlu0 %v391, 127
      %v399 = vpop.permute.xlu0 %398
      %400 = vrot.lane.b32.xlu0 %v392, 127
      %v401 = vpop.permute.xlu0 %400
      %v402 = vsel %vm351, %v397, %v399
      %v403 = vsel %vm351, %v399, %v401
      %406 = vst [vmem:[#allocation3 + $0x50] sm:$0xff] %v402
      %407 = vst [vmem:[#allocation3 + $0x58] sm:$0xff] %v403
      %v408 = vld [vmem:[#allocation2 + $0x8] sm:$0xff]
      %v409 = vld [vmem:[#allocation2 + $0x10] sm:$0xff]
      %v410 = vld [vmem:[#allocation2 + $0x18] sm:$0xff]
      %411 = vrot.lane.b32.xlu0 %v245, 15
      %v412 = vpop.permute.xlu0 %411
      %413 = vrot.lane.b32.xlu0 %v246, 15
      %v414 = vpop.permute.xlu0 %413
      %v415 = vsel %vm337, %v412, %v414
      %v419 = vmul.f32 %v408, %v412
      %v420 = vmul.f32 %v409, %v415
      %v421 = vmul.f32 %v410, %v414
      %425 = vrot.lane.b32.xlu0 %v419, 113
      %v426 = vpop.permute.xlu0 %425
      %427 = vrot.lane.b32.xlu0 %v420, 113
      %v428 = vpop.permute.xlu0 %427
      %429 = vrot.lane.b32.xlu0 %v421, 113
      %v430 = vpop.permute.xlu0 %429
      %v431 = vsel %vm320, %v426, %v428
      %v432 = vsel %vm320, %v428, %v430
      %435 = vst [vmem:[#allocation3 + $0x60] sm:$0xff] %v431
      %436 = vst [vmem:[#allocation3 + $0x68] sm:$0xff] %v432
      %v437 = vld [vmem:[#allocation2 + $0x8] sm:$0xff]
      %v438 = vld [vmem:[#allocation2 + $0x10] sm:$0xff]
      %v439 = vld [vmem:[#allocation2 + $0x18] sm:$0xff]
      %443 = vrot.lane.b32.xlu0 %v437, 112
      %v444 = vpop.permute.xlu0 %443
      %445 = vrot.lane.b32.xlu0 %v438, 112
      %v446 = vpop.permute.xlu0 %445
      %447 = vrot.lane.b32.xlu0 %v439, 112
      %v448 = vpop.permute.xlu0 %447
      %vm449 = vcmask 916480
      %v450 = vsel %vm449, %v444, %v446
      %v451 = vsel %vm449, %v446, %v448
      %454 = vst [vmem:[#allocation3 + $0x70] sm:$0xff] %v450
      %455 = vst [vmem:[#allocation3 + $0x78] sm:$0xff] %v451
      %v456 = vld [vmem:[#allocation2 + $0x8] sm:$0xff]
      %v457 = vld [vmem:[#allocation2 + $0x10] sm:$0xff]
      %v458 = vld [vmem:[#allocation2 + $0x18] sm:$0xff]
      %459 = vrot.lane.b32.xlu0 %v257, 17
      %v460 = vpop.permute.xlu0 %459
      %461 = vrot.lane.b32.xlu0 %v258, 17
      %v462 = vpop.permute.xlu0 %461
      %v463 = vsel %vm285, %v460, %v462
      %v467 = vmul.f32 %v456, %v460
      %v468 = vmul.f32 %v457, %v463
      %v469 = vmul.f32 %v458, %v462
      %473 = vrot.lane.b32.xlu0 %v467, 111
      %v474 = vpop.permute.xlu0 %473
      %475 = vrot.lane.b32.xlu0 %v468, 111
      %v476 = vpop.permute.xlu0 %475
      %477 = vrot.lane.b32.xlu0 %v469, 111
      %v478 = vpop.permute.xlu0 %477
      %v479 = vsel %vm268, %v474, %v476
      %v480 = vsel %vm268, %v476, %v478
      %483 = vst [vmem:[#allocation3 + $0x80] sm:$0xff] %v479
      %484 = vst [vmem:[#allocation3 + $0x88] sm:$0xff] %v480
      %v485 = vld [vmem:[%s1] sm:$0xff]
      %v486 = vld [vmem:[#allocation3] sm:$0xff]
      %v487 = vld [vmem:[#allocation3 + $0x8] sm:$0xff]
      %v488 = vld [vmem:[#allocation3 + $0x10] sm:$0xff]
      %v489 = vld [vmem:[#allocation3 + $0x18] sm:$0xff]
      %v490 = vld [vmem:[#allocation3 + $0x20] sm:$0xff]
      %v491 = vld [vmem:[#allocation3 + $0x28] sm:$0xff]
      %v492 = vld [vmem:[#allocation3 + $0x30] sm:$0xff]
      %v493 = vld [vmem:[#allocation3 + $0x38] sm:$0xff]
      %v494 = vld [vmem:[#allocation3 + $0x40] sm:$0xff]
      %v495 = vld [vmem:[#allocation3 + $0x48] sm:$0xff]
      %v496 = vld [vmem:[#allocation3 + $0x50] sm:$0xff]
      %v497 = vld [vmem:[#allocation3 + $0x58] sm:$0xff]
      %v498 = vld [vmem:[#allocation3 + $0x60] sm:$0xff]
      %v499 = vld [vmem:[#allocation3 + $0x68] sm:$0xff]
      %v500 = vld [vmem:[#allocation3 + $0x70] sm:$0xff]
      %v501 = vld [vmem:[#allocation3 + $0x78] sm:$0xff]
      %v502 = vld [vmem:[#allocation3 + $0x80] sm:$0xff]
      %v503 = vld [vmem:[#allocation3 + $0x88] sm:$0xff]
      %vm504 = vcmask 588800
      %v506 = vsel %vm504, %v485, 0
      %508 = vmatprep.subr.mxu0 %v487
      %509 = vmatpush1.msra.mxu0 %v486
      %510 = vmatprep.subr.mxu0 %v489
      %511 = vmatpush1.msra.mxu0 %v488
      %512 = vmatprep.subr.mxu0 %v491
      %513 = vmatpush1.msra.mxu0 %v490
      %514 = vmatprep.subr.mxu0 %v493
      %515 = vmatpush1.msra.mxu0 %v492
      %516 = vmatprep.subr.mxu0 %v495
      %517 = vmatpush1.msra.mxu0 %v494
      %518 = vmatprep.subr.mxu0 %v497
      %519 = vmatpush1.msra.mxu0 %v496
      %520 = vmatprep.subr.mxu0 %v499
      %521 = vmatpush1.msra.mxu0 %v498
      %522 = vmatprep.subr.mxu0 %v501
      %523 = vmatpush1.msra.mxu0 %v500
      %524 = vmatprep.subr.mxu0 %v503
      %525 = vmatpush1.msra.mxu0 %v502
      %526 = vmatprep.subr.mxu0 0.0
      %527 = vmatpush1.msra.mxu0 0.0
      %528 = vmatprep.subr.mxu0 0.0
      %529 = vmatpush1.msra.mxu0 0.0
      %530 = vmatprep.subr.mxu0 0.0
      %531 = vmatpush1.msra.mxu0 0.0
      %532 = vmatprep.subr.mxu0 0.0
      %533 = vmatpush1.msra.mxu0 0.0
      %534 = vmatprep.subr.mxu0 0.0
      %535 = vmatpush1.msra.mxu0 0.0
      %536 = vmatprep.subr.mxu0 0.0
      %537 = vmatpush1.msra.mxu0 0.0
      %538 = vmatprep.subr.mxu0 0.0
      %539 = vmatpush1.msra.mxu0 0.0
      %540 = vmatprep.subr.mxu0 0.0
      %541 = vmatpush1.msra.mxu0 0.0
      %542 = vmatprep.subr.mxu0 0.0
      %543 = vmatpush1.msra.mxu0 0.0
      %544 = vmatprep.subr.mxu0 0.0
      %545 = vmatpush1.msra.mxu0 0.0
      %546 = vmatprep.subr.mxu0 0.0
      %547 = vmatpush1.msra.mxu0 0.0
      %548 = vmatprep.subr.mxu0 0.0
      %549 = vmatpush1.msra.mxu0 0.0
      %550 = vmatprep.subr.mxu0 0.0
      %551 = vmatpush1.msra.mxu0 0.0
      %552 = vmatprep.subr.mxu0 0.0
      %553 = vmatpush1.msra.mxu0 0.0
      %554 = vmatprep.subr.mxu0 0.0
      %555 = vmatpush1.msra.mxu0 0.0
      %556 = vmatprep.subr.mxu0 0.0
      %557 = vmatpush1.msra.mxu0 0.0
      %558 = vmatprep.subr.mxu0 0.0
      %559 = vmatpush1.msra.mxu0 0.0
      %560 = vmatprep.subr.mxu0 0.0
      %561 = vmatpush1.msra.mxu0 0.0
      %562 = vmatprep.subr.mxu0 0.0
      %563 = vmatpush1.msra.mxu0 0.0
      %564 = vmatprep.subr.mxu0 0.0
      %565 = vmatpush1.msra.mxu0 0.0
      %566 = vmatprep.subr.mxu0 0.0
      %567 = vmatpush1.msra.mxu0 0.0
      %568 = vmatprep.subr.mxu0 0.0
      %569 = vmatpush1.msra.mxu0 0.0
      %570 = vmatprep.subr.mxu0 0.0
      %571 = vmatpush1.msra.mxu0 0.0
      %572 = vmatprep.mubr.f32.mxu0 0.0
      %573 = vmatmul.mubr.f32.gmra.mrb[0].mxu0 %v506
      %v574 = vpop.f32.mrb[0].mxu0
      %v575 = vadd.f32 0.0, %v574
      %v576 = vpop.f32.mrb[0].mxu0
      %v577 = vadd.f32 0.0, %v576
      %578 = vdwg.mxu0
      %v579 = vadd.f32 %v575, %v577
      %580 = vadd.xlane.f32.xlu0 %v579
      %v581 = vpop.xlane.xlu0 %580
      %v582 = vrcp.pop 256.0
      %v583 = vmul.f32 %v581, %v582
      %v584 = vsub.f32 %v575, %v583
      %v585 = vsub.f32 %v577, %v583
      %v586 = vmul.f32 %v584, %v584
      %v587 = vmul.f32 %v585, %v585
      %v588 = vadd.f32 %v586, %v587
      %589 = vadd.xlane.f32.xlu0 %v588
      %v590 = vpop.xlane.xlu0 %589
      %v591 = vmul.f32 %v590, %v582
      %v592 = vadd.f32 %v591, 1e-05
      %v593 = vrsqrt.pop %v592
      %v594 = vmul.f32 %v584, %v593
      %v595 = vmul.f32 %v585, %v593
      %v596 = vld [vmem:[%s2] sm:$0xff]
      %598 = vset.pattern.permute.xlu0 0
      %599 = vperm.xlu0 %598, %v596
      %v600 = vpop.permute.xlu0 %599
      %v602 = vmul.f32 %v594, %v600
      %v603 = vmul.f32 %v595, %v600
      %v604 = vld [vmem:[%s3] sm:$0xff]
      %606 = vset.pattern.permute.xlu0 0
      %607 = vperm.xlu0 %606, %v604
      %v608 = vpop.permute.xlu0 %607
      %v610 = vadd.f32 %v602, %v608
      %v611 = vadd.f32 %v603, %v608
      %vm612 = vcmp.ge.f32.partialorder %v610, 0.0
      %vm613 = vcmp.ge.f32.partialorder %v611, 0.0
      %v614 = vmul.f32 %v610, 0.01
      %v615 = vmul.f32 %v611, 0.01
      %v616 = vsel %vm612, %v610, %v614
      %v617 = vsel %vm613, %v611, %v615
      %618 = vst [vmem:[#allocation2 + $0x8] sm:$0xff] %v616
      %619 = vst [vmem:[#allocation2 + $0x10] sm:$0xff] %v617
      %v620 = vld [vmem:[#allocation2] sm:$0xff]
      %v621 = vld [vmem:[#allocation2 + $0x8] sm:$0xff]
      %v622 = vld [vmem:[#allocation2 + $0x10] sm:$0xff]
      %v623 = vmul.f32 %v620, %v265
      %v624 = vmul.f32 %v621, %v269
      %v625 = vmul.f32 %v622, %v267
      %629 = vrot.lane.b32.xlu0 %v623, 17
      %v630 = vpop.permute.xlu0 %629
      %631 = vrot.lane.b32.xlu0 %v624, 17
      %v632 = vpop.permute.xlu0 %631
      %633 = vrot.lane.b32.xlu0 %v625, 17
      %v634 = vpop.permute.xlu0 %633
      %v635 = vsel %vm285, %v630, %v632
      %v636 = vsel %vm285, %v632, %v634
      %639 = vst [vmem:[#allocation3] sm:$0xff] %v635
      %640 = vst [vmem:[#allocation3 + $0x8] sm:$0xff] %v636
      %v641 = vld [vmem:[#allocation2] sm:$0xff]
      %v642 = vld [vmem:[#allocation2 + $0x8] sm:$0xff]
      %v643 = vld [vmem:[#allocation2 + $0x10] sm:$0xff]
      %647 = vrot.lane.b32.xlu0 %v641, 16
      %v648 = vpop.permute.xlu0 %647
      %649 = vrot.lane.b32.xlu0 %v642, 16
      %v650 = vpop.permute.xlu0 %649
      %651 = vrot.lane.b32.xlu0 %v643, 16
      %v652 = vpop.permute.xlu0 %651
      %v653 = vsel %vm304, %v648, %v650
      %v654 = vsel %vm304, %v650, %v652
      %657 = vst [vmem:[#allocation3 + $0x10] sm:$0xff] %v653
      %658 = vst [vmem:[#allocation3 + $0x18] sm:$0xff] %v654
      %v659 = vld [vmem:[#allocation2] sm:$0xff]
      %v660 = vld [vmem:[#allocation2 + $0x8] sm:$0xff]
      %v661 = vld [vmem:[#allocation2 + $0x10] sm:$0xff]
      %v662 = vmul.f32 %v659, %v317
      %v663 = vmul.f32 %v660, %v321
      %v664 = vmul.f32 %v661, %v319
      %668 = vrot.lane.b32.xlu0 %v662, 15
      %v669 = vpop.permute.xlu0 %668
      %670 = vrot.lane.b32.xlu0 %v663, 15
      %v671 = vpop.permute.xlu0 %670
      %672 = vrot.lane.b32.xlu0 %v664, 15
      %v673 = vpop.permute.xlu0 %672
      %v674 = vsel %vm337, %v669, %v671
      %v675 = vsel %vm337, %v671, %v673
      %678 = vst [vmem:[#allocation3 + $0x20] sm:$0xff] %v674
      %679 = vst [vmem:[#allocation3 + $0x28] sm:$0xff] %v675
      %v680 = vld [vmem:[#allocation2] sm:$0xff]
      %v681 = vld [vmem:[#allocation2 + $0x8] sm:$0xff]
      %v682 = vld [vmem:[#allocation2 + $0x10] sm:$0xff]
      %v683 = vmul.f32 %v680, %v348
      %v684 = vmul.f32 %v681, %v352
      %v685 = vmul.f32 %v682, %v350
      %689 = vrot.lane.b32.xlu0 %v683, 1
      %v690 = vpop.permute.xlu0 %689
      %691 = vrot.lane.b32.xlu0 %v684, 1
      %v692 = vpop.permute.xlu0 %691
      %693 = vrot.lane.b32.xlu0 %v685, 1
      %v694 = vpop.permute.xlu0 %693
      %v695 = vsel %vm368, %v690, %v692
      %v696 = vsel %vm368, %v692, %v694
      %699 = vst [vmem:[#allocation3 + $0x30] sm:$0xff] %v695
      %700 = vst [vmem:[#allocation3 + $0x38] sm:$0xff] %v696
      %v701 = vld [vmem:[#allocation2 + $0x8] sm:$0xff]
      %v702 = vld [vmem:[#allocation2 + $0x10] sm:$0xff]
      %703 = vst [vmem:[#allocation3 + $0x40] sm:$0xff] %v701
      %704 = vst [vmem:[#allocation3 + $0x48] sm:$0xff] %v702
      %v705 = vld [vmem:[#allocation2 + $0x8] sm:$0xff]
      %v706 = vld [vmem:[#allocation2 + $0x10] sm:$0xff]
      %v707 = vld [vmem:[#allocation2 + $0x18] sm:$0xff]
      %v708 = vmul.f32 %v705, %v383
      %v709 = vmul.f32 %v706, %v386
      %v710 = vmul.f32 %v707, %v385
      %714 = vrot.lane.b32.xlu0 %v708, 127
      %v715 = vpop.permute.xlu0 %714
      %716 = vrot.lane.b32.xlu0 %v709, 127
      %v717 = vpop.permute.xlu0 %716
      %718 = vrot.lane.b32.xlu0 %v710, 127
      %v719 = vpop.permute.xlu0 %718
      %v720 = vsel %vm351, %v715, %v717
      %v721 = vsel %vm351, %v717, %v719
      %724 = vst [vmem:[#allocation3 + $0x50] sm:$0xff] %v720
      %725 = vst [vmem:[#allocation3 + $0x58] sm:$0xff] %v721
      %v726 = vld [vmem:[#allocation2 + $0x8] sm:$0xff]
      %v727 = vld [vmem:[#allocation2 + $0x10] sm:$0xff]
      %v728 = vld [vmem:[#allocation2 + $0x18] sm:$0xff]
      %v729 = vmul.f32 %v726, %v412
      %v730 = vmul.f32 %v727, %v415
      %v731 = vmul.f32 %v728, %v414
      %735 = vrot.lane.b32.xlu0 %v729, 113
      %v736 = vpop.permute.xlu0 %735
      %737 = vrot.lane.b32.xlu0 %v730, 113
      %v738 = vpop.permute.xlu0 %737
      %739 = vrot.lane.b32.xlu0 %v731, 113
      %v740 = vpop.permute.xlu0 %739
      %v741 = vsel %vm320, %v736, %v738
      %v742 = vsel %vm320, %v738, %v740
      %745 = vst [vmem:[#allocation3 + $0x60] sm:$0xff] %v741
      %746 = vst [vmem:[#allocation3 + $0x68] sm:$0xff] %v742
      %v747 = vld [vmem:[#allocation2 + $0x8] sm:$0xff]
      %v748 = vld [vmem:[#allocation2 + $0x10] sm:$0xff]
      %v749 = vld [vmem:[#allocation2 + $0x18] sm:$0xff]
      %753 = vrot.lane.b32.xlu0 %v747, 112
      %v754 = vpop.permute.xlu0 %753
      %755 = vrot.lane.b32.xlu0 %v748, 112
      %v756 = vpop.permute.xlu0 %755
      %757 = vrot.lane.b32.xlu0 %v749, 112
      %v758 = vpop.permute.xlu0 %757
      %v759 = vsel %vm449, %v754, %v756
      %v760 = vsel %vm449, %v756, %v758
      %763 = vst [vmem:[#allocation3 + $0x70] sm:$0xff] %v759
      %764 = vst [vmem:[#allocation3 + $0x78] sm:$0xff] %v760
      %v765 = vld [vmem:[#allocation2 + $0x8] sm:$0xff]
      %v766 = vld [vmem:[#allocation2 + $0x10] sm:$0xff]
      %v767 = vld [vmem:[#allocation2 + $0x18] sm:$0xff]
      %v768 = vmul.f32 %v765, %v460
      %v769 = vmul.f32 %v766, %v463
      %v770 = vmul.f32 %v767, %v462
      %774 = vrot.lane.b32.xlu0 %v768, 111
      %v775 = vpop.permute.xlu0 %774
      %776 = vrot.lane.b32.xlu0 %v769, 111
      %v777 = vpop.permute.xlu0 %776
      %778 = vrot.lane.b32.xlu0 %v770, 111
      %v779 = vpop.permute.xlu0 %778
      %v780 = vsel %vm268, %v775, %v777
      %v781 = vsel %vm268, %v777, %v779
      %784 = vst [vmem:[#allocation3 + $0x80] sm:$0xff] %v780
      %785 = vst [vmem:[#allocation3 + $0x88] sm:$0xff] %v781
      %s786 = scalar_lea.vmem %s1, 8
      %v787 = vld [vmem:[%s786] sm:$0xff]
      %v788 = vld [vmem:[#allocation3] sm:$0xff]
      %v789 = vld [vmem:[#allocation3 + $0x8] sm:$0xff]
      %v790 = vld [vmem:[#allocation3 + $0x10] sm:$0xff]
      %v791 = vld [vmem:[#allocation3 + $0x18] sm:$0xff]
      %v792 = vld [vmem:[#allocation3 + $0x20] sm:$0xff]
      %v793 = vld [vmem:[#allocation3 + $0x28] sm:$0xff]
      %v794 = vld [vmem:[#allocation3 + $0x30] sm:$0xff]
      %v795 = vld [vmem:[#allocation3 + $0x38] sm:$0xff]
      %v796 = vld [vmem:[#allocation3 + $0x40] sm:$0xff]
      %v797 = vld [vmem:[#allocation3 + $0x48] sm:$0xff]
      %v798 = vld [vmem:[#allocation3 + $0x50] sm:$0xff]
      %v799 = vld [vmem:[#allocation3 + $0x58] sm:$0xff]
      %v800 = vld [vmem:[#allocation3 + $0x60] sm:$0xff]
      %v801 = vld [vmem:[#allocation3 + $0x68] sm:$0xff]
      %v802 = vld [vmem:[#allocation3 + $0x70] sm:$0xff]
      %v803 = vld [vmem:[#allocation3 + $0x78] sm:$0xff]
      %v804 = vld [vmem:[#allocation3 + $0x80] sm:$0xff]
      %v805 = vld [vmem:[#allocation3 + $0x88] sm:$0xff]
      %v807 = vsel %vm504, %v787, 0
      %809 = vmatprep.subr.mxu0 %v789
      %810 = vmatpush1.msra.mxu0 %v788
      %811 = vmatprep.subr.mxu0 %v791
      %812 = vmatpush1.msra.mxu0 %v790
      %813 = vmatprep.subr.mxu0 %v793
      %814 = vmatpush1.msra.mxu0 %v792
      %815 = vmatprep.subr.mxu0 %v795
      %816 = vmatpush1.msra.mxu0 %v794
      %817 = vmatprep.subr.mxu0 %v797
      %818 = vmatpush1.msra.mxu0 %v796
      %819 = vmatprep.subr.mxu0 %v799
      %820 = vmatpush1.msra.mxu0 %v798
      %821 = vmatprep.subr.mxu0 %v801
      %822 = vmatpush1.msra.mxu0 %v800
      %823 = vmatprep.subr.mxu0 %v803
      %824 = vmatpush1.msra.mxu0 %v802
      %825 = vmatprep.subr.mxu0 %v805
      %826 = vmatpush1.msra.mxu0 %v804
      %827 = vmatprep.subr.mxu0 0.0
      %828 = vmatpush1.msra.mxu0 0.0
      %829 = vmatprep.subr.mxu0 0.0
      %830 = vmatpush1.msra.mxu0 0.0
      %831 = vmatprep.subr.mxu0 0.0
      %832 = vmatpush1.msra.mxu0 0.0
      %833 = vmatprep.subr.mxu0 0.0
      %834 = vmatpush1.msra.mxu0 0.0
      %835 = vmatprep.subr.mxu0 0.0
      %836 = vmatpush1.msra.mxu0 0.0
      %837 = vmatprep.subr.mxu0 0.0
      %838 = vmatpush1.msra.mxu0 0.0
      %839 = vmatprep.subr.mxu0 0.0
      %840 = vmatpush1.msra.mxu0 0.0
      %841 = vmatprep.subr.mxu0 0.0
      %842 = vmatpush1.msra.mxu0 0.0
      %843 = vmatprep.subr.mxu0 0.0
      %844 = vmatpush1.msra.mxu0 0.0
      %845 = vmatprep.subr.mxu0 0.0
      %846 = vmatpush1.msra.mxu0 0.0
      %847 = vmatprep.subr.mxu0 0.0
      %848 = vmatpush1.msra.mxu0 0.0
      %849 = vmatprep.subr.mxu0 0.0
      %850 = vmatpush1.msra.mxu0 0.0
      %851 = vmatprep.subr.mxu0 0.0
      %852 = vmatpush1.msra.mxu0 0.0
      %853 = vmatprep.subr.mxu0 0.0
      %854 = vmatpush1.msra.mxu0 0.0
      %855 = vmatprep.subr.mxu0 0.0
      %856 = vmatpush1.msra.mxu0 0.0
      %857 = vmatprep.subr.mxu0 0.0
      %858 = vmatpush1.msra.mxu0 0.0
      %859 = vmatprep.subr.mxu0 0.0
      %860 = vmatpush1.msra.mxu0 0.0
      %861 = vmatprep.subr.mxu0 0.0
      %862 = vmatpush1.msra.mxu0 0.0
      %863 = vmatprep.subr.mxu0 0.0
      %864 = vmatpush1.msra.mxu0 0.0
      %865 = vmatprep.subr.mxu0 0.0
      %866 = vmatpush1.msra.mxu0 0.0
      %867 = vmatprep.subr.mxu0 0.0
      %868 = vmatpush1.msra.mxu0 0.0
      %869 = vmatprep.subr.mxu0 0.0
      %870 = vmatpush1.msra.mxu0 0.0
      %871 = vmatprep.subr.mxu0 0.0
      %872 = vmatpush1.msra.mxu0 0.0
      %873 = vmatprep.mubr.f32.mxu0 0.0
      %874 = vmatmul.mubr.f32.gmra.mrb[0].mxu0 %v807
      %v875 = vpop.f32.mrb[0].mxu0
      %v876 = vadd.f32 0.0, %v875
      %v877 = vpop.f32.mrb[0].mxu0
      %v878 = vadd.f32 0.0, %v877
      %879 = vdwg.mxu0
      %v880 = vadd.f32 %v876, %v878
      %881 = vadd.xlane.f32.xlu0 %v880
      %v882 = vpop.xlane.xlu0 %881
      %v883 = vmul.f32 %v882, %v582
      %v884 = vsub.f32 %v876, %v883
      %v885 = vsub.f32 %v878, %v883
      %v886 = vmul.f32 %v884, %v884
      %v887 = vmul.f32 %v885, %v885
      %v888 = vadd.f32 %v886, %v887
      %889 = vadd.xlane.f32.xlu0 %v888
      %v890 = vpop.xlane.xlu0 %889
      %v891 = vmul.f32 %v890, %v582
      %v892 = vadd.f32 %v891, 1e-05
      %v893 = vrsqrt.pop %v892
      %v894 = vmul.f32 %v884, %v893
      %v895 = vmul.f32 %v885, %v893
      %s896 = scalar_lea.vmem %s2, 8
      %v897 = vld [vmem:[%s896] sm:$0xff]
      %899 = vset.pattern.permute.xlu0 0
      %900 = vperm.xlu0 %899, %v897
      %v901 = vpop.permute.xlu0 %900
      %v903 = vmul.f32 %v894, %v901
      %v904 = vmul.f32 %v895, %v901
      %s905 = scalar_lea.vmem %s3, 8
      %v906 = vld [vmem:[%s905] sm:$0xff]
      %908 = vset.pattern.permute.xlu0 0
      %909 = vperm.xlu0 %908, %v906
      %v910 = vpop.permute.xlu0 %909
      %v912 = vadd.f32 %v903, %v910
      %v913 = vadd.f32 %v904, %v910
      %vm914 = vcmp.ge.f32.partialorder %v912, 0.0
      %vm915 = vcmp.ge.f32.partialorder %v913, 0.0
      %v916 = vmul.f32 %v912, 0.01
      %v917 = vmul.f32 %v913, 0.01
      %v918 = vsel %vm914, %v912, %v916
      %v919 = vsel %vm915, %v913, %v917
      %920 = vst [vmem:[#allocation2 + $0x8] sm:$0xff] %v918
      %921 = vst [vmem:[#allocation2 + $0x10] sm:$0xff] %v919
      %v922 = vld [vmem:[#allocation2] sm:$0xff]
      %v923 = vld [vmem:[#allocation2 + $0x8] sm:$0xff]
      %v924 = vld [vmem:[#allocation2 + $0x10] sm:$0xff]
      %v925 = vmul.f32 %v922, %v265
      %v926 = vmul.f32 %v923, %v269
      %v927 = vmul.f32 %v924, %v267
      %931 = vrot.lane.b32.xlu0 %v925, 17
      %v932 = vpop.permute.xlu0 %931
      %933 = vrot.lane.b32.xlu0 %v926, 17
      %v934 = vpop.permute.xlu0 %933
      %935 = vrot.lane.b32.xlu0 %v927, 17
      %v936 = vpop.permute.xlu0 %935
      %v937 = vsel %vm285, %v932, %v934
      %v938 = vsel %vm285, %v934, %v936
      %941 = vst [vmem:[#allocation3] sm:$0xff] %v937
      %942 = vst [vmem:[#allocation3 + $0x8] sm:$0xff] %v938
      %v943 = vld [vmem:[#allocation2] sm:$0xff]
      %v944 = vld [vmem:[#allocation2 + $0x8] sm:$0xff]
      %v945 = vld [vmem:[#allocation2 + $0x10] sm:$0xff]
      %949 = vrot.lane.b32.xlu0 %v943, 16
      %v950 = vpop.permute.xlu0 %949
      %951 = vrot.lane.b32.xlu0 %v944, 16
      %v952 = vpop.permute.xlu0 %951
      %953 = vrot.lane.b32.xlu0 %v945, 16
      %v954 = vpop.permute.xlu0 %953
      %v955 = vsel %vm304, %v950, %v952
      %v956 = vsel %vm304, %v952, %v954
      %959 = vst [vmem:[#allocation3 + $0x10] sm:$0xff] %v955
      %960 = vst [vmem:[#allocation3 + $0x18] sm:$0xff] %v956
      %v961 = vld [vmem:[#allocation2] sm:$0xff]
      %v962 = vld [vmem:[#allocation2 + $0x8] sm:$0xff]
      %v963 = vld [vmem:[#allocation2 + $0x10] sm:$0xff]
      %v964 = vmul.f32 %v961, %v317
      %v965 = vmul.f32 %v962, %v321
      %v966 = vmul.f32 %v963, %v319
      %970 = vrot.lane.b32.xlu0 %v964, 15
      %v971 = vpop.permute.xlu0 %970
      %972 = vrot.lane.b32.xlu0 %v965, 15
      %v973 = vpop.permute.xlu0 %972
      %974 = vrot.lane.b32.xlu0 %v966, 15
      %v975 = vpop.permute.xlu0 %974
      %v976 = vsel %vm337, %v971, %v973
      %v977 = vsel %vm337, %v973, %v975
      %980 = vst [vmem:[#allocation3 + $0x20] sm:$0xff] %v976
      %981 = vst [vmem:[#allocation3 + $0x28] sm:$0xff] %v977
      %v982 = vld [vmem:[#allocation2] sm:$0xff]
      %v983 = vld [vmem:[#allocation2 + $0x8] sm:$0xff]
      %v984 = vld [vmem:[#allocation2 + $0x10] sm:$0xff]
      %v985 = vmul.f32 %v982, %v348
      %v986 = vmul.f32 %v983, %v352
      %v987 = vmul.f32 %v984, %v350
      %991 = vrot.lane.b32.xlu0 %v985, 1
      %v992 = vpop.permute.xlu0 %991
      %993 = vrot.lane.b32.xlu0 %v986, 1
      %v994 = vpop.permute.xlu0 %993
      %995 = vrot.lane.b32.xlu0 %v987, 1
      %v996 = vpop.permute.xlu0 %995
      %v997 = vsel %vm368, %v992, %v994
      %v998 = vsel %vm368, %v994, %v996
      %1001 = vst [vmem:[#allocation3 + $0x30] sm:$0xff] %v997
      %1002 = vst [vmem:[#allocation3 + $0x38] sm:$0xff] %v998
      %v1003 = vld [vmem:[#allocation2 + $0x8] sm:$0xff]
      %v1004 = vld [vmem:[#allocation2 + $0x10] sm:$0xff]
      %1005 = vst [vmem:[#allocation3 + $0x40] sm:$0xff] %v1003
      %1006 = vst [vmem:[#allocation3 + $0x48] sm:$0xff] %v1004
      %v1007 = vld [vmem:[#allocation2 + $0x8] sm:$0xff]
      %v1008 = vld [vmem:[#allocation2 + $0x10] sm:$0xff]
      %v1009 = vld [vmem:[#allocation2 + $0x18] sm:$0xff]
      %v1010 = vmul.f32 %v1007, %v383
      %v1011 = vmul.f32 %v1008, %v386
      %v1012 = vmul.f32 %v1009, %v385
      %1016 = vrot.lane.b32.xlu0 %v1010, 127
      %v1017 = vpop.permute.xlu0 %1016
      %1018 = vrot.lane.b32.xlu0 %v1011, 127
      %v1019 = vpop.permute.xlu0 %1018
      %1020 = vrot.lane.b32.xlu0 %v1012, 127
      %v1021 = vpop.permute.xlu0 %1020
      %v1022 = vsel %vm351, %v1017, %v1019
      %v1023 = vsel %vm351, %v1019, %v1021
      %1026 = vst [vmem:[#allocation3 + $0x50] sm:$0xff] %v1022
      %1027 = vst [vmem:[#allocation3 + $0x58] sm:$0xff] %v1023
      %v1028 = vld [vmem:[#allocation2 + $0x8] sm:$0xff]
      %v1029 = vld [vmem:[#allocation2 + $0x10] sm:$0xff]
      %v1030 = vld [vmem:[#allocation2 + $0x18] sm:$0xff]
      %v1031 = vmul.f32 %v1028, %v412
      %v1032 = vmul.f32 %v1029, %v415
      %v1033 = vmul.f32 %v1030, %v414
      %1037 = vrot.lane.b32.xlu0 %v1031, 113
      %v1038 = vpop.permute.xlu0 %1037
      %1039 = vrot.lane.b32.xlu0 %v1032, 113
      %v1040 = vpop.permute.xlu0 %1039
      %1041 = vrot.lane.b32.xlu0 %v1033, 113
      %v1042 = vpop.permute.xlu0 %1041
      %v1043 = vsel %vm320, %v1038, %v1040
      %v1044 = vsel %vm320, %v1040, %v1042
      %1047 = vst [vmem:[#allocation3 + $0x60] sm:$0xff] %v1043
      %1048 = vst [vmem:[#allocation3 + $0x68] sm:$0xff] %v1044
      %v1049 = vld [vmem:[#allocation2 + $0x8] sm:$0xff]
      %v1050 = vld [vmem:[#allocation2 + $0x10] sm:$0xff]
      %v1051 = vld [vmem:[#allocation2 + $0x18] sm:$0xff]
      %1055 = vrot.lane.b32.xlu0 %v1049, 112
      %v1056 = vpop.permute.xlu0 %1055
      %1057 = vrot.lane.b32.xlu0 %v1050, 112
      %v1058 = vpop.permute.xlu0 %1057
      %1059 = vrot.lane.b32.xlu0 %v1051, 112
      %v1060 = vpop.permute.xlu0 %1059
      %v1061 = vsel %vm449, %v1056, %v1058
      %v1062 = vsel %vm449, %v1058, %v1060
      %1065 = vst [vmem:[#allocation3 + $0x70] sm:$0xff] %v1061
      %1066 = vst [vmem:[#allocation3 + $0x78] sm:$0xff] %v1062
      %v1067 = vld [vmem:[#allocation2 + $0x8] sm:$0xff]
      %v1068 = vld [vmem:[#allocation2 + $0x10] sm:$0xff]
      %v1069 = vld [vmem:[#allocation2 + $0x18] sm:$0xff]
      %v1070 = vmul.f32 %v1067, %v460
      %v1071 = vmul.f32 %v1068, %v463
      %v1072 = vmul.f32 %v1069, %v462
      %1076 = vrot.lane.b32.xlu0 %v1070, 111
      %v1077 = vpop.permute.xlu0 %1076
      %1078 = vrot.lane.b32.xlu0 %v1071, 111
      %v1079 = vpop.permute.xlu0 %1078
      %1080 = vrot.lane.b32.xlu0 %v1072, 111
      %v1081 = vpop.permute.xlu0 %1080
      %v1082 = vsel %vm268, %v1077, %v1079
      %v1083 = vsel %vm268, %v1079, %v1081
      %1086 = vst [vmem:[#allocation3 + $0x80] sm:$0xff] %v1082
      %1087 = vst [vmem:[#allocation3 + $0x88] sm:$0xff] %v1083
      %s1088 = scalar_lea.vmem %s1, 16
      %v1089 = vld [vmem:[%s1088] sm:$0xff]
      %v1090 = vld [vmem:[#allocation3] sm:$0xff]
      %v1091 = vld [vmem:[#allocation3 + $0x8] sm:$0xff]
      %v1092 = vld [vmem:[#allocation3 + $0x10] sm:$0xff]
      %v1093 = vld [vmem:[#allocation3 + $0x18] sm:$0xff]
      %v1094 = vld [vmem:[#allocation3 + $0x20] sm:$0xff]
      %v1095 = vld [vmem:[#allocation3 + $0x28] sm:$0xff]
      %v1096 = vld [vmem:[#allocation3 + $0x30] sm:$0xff]
      %v1097 = vld [vmem:[#allocation3 + $0x38] sm:$0xff]
      %v1098 = vld [vmem:[#allocation3 + $0x40] sm:$0xff]
      %v1099 = vld [vmem:[#allocation3 + $0x48] sm:$0xff]
      %v1100 = vld [vmem:[#allocation3 + $0x50] sm:$0xff]
      %v1101 = vld [vmem:[#allocation3 + $0x58] sm:$0xff]
      %v1102 = vld [vmem:[#allocation3 + $0x60] sm:$0xff]
      %v1103 = vld [vmem:[#allocation3 + $0x68] sm:$0xff]
      %v1104 = vld [vmem:[#allocation3 + $0x70] sm:$0xff]
      %v1105 = vld [vmem:[#allocation3 + $0x78] sm:$0xff]
      %v1106 = vld [vmem:[#allocation3 + $0x80] sm:$0xff]
      %v1107 = vld [vmem:[#allocation3 + $0x88] sm:$0xff]
      %v1109 = vsel %vm504, %v1089, 0
      %1111 = vmatprep.subr.mxu0 %v1091
      %1112 = vmatpush1.msra.mxu0 %v1090
      %1113 = vmatprep.subr.mxu0 %v1093
      %1114 = vmatpush1.msra.mxu0 %v1092
      %1115 = vmatprep.subr.mxu0 %v1095
      %1116 = vmatpush1.msra.mxu0 %v1094
      %1117 = vmatprep.subr.mxu0 %v1097
      %1118 = vmatpush1.msra.mxu0 %v1096
      %1119 = vmatprep.subr.mxu0 %v1099
      %1120 = vmatpush1.msra.mxu0 %v1098
      %1121 = vmatprep.subr.mxu0 %v1101
      %1122 = vmatpush1.msra.mxu0 %v1100
      %1123 = vmatprep.subr.mxu0 %v1103
      %1124 = vmatpush1.msra.mxu0 %v1102
      %1125 = vmatprep.subr.mxu0 %v1105
      %1126 = vmatpush1.msra.mxu0 %v1104
      %1127 = vmatprep.subr.mxu0 %v1107
      %1128 = vmatpush1.msra.mxu0 %v1106
      %1129 = vmatprep.subr.mxu0 0.0
      %1130 = vmatpush1.msra.mxu0 0.0
      %1131 = vmatprep.subr.mxu0 0.0
      %1132 = vmatpush1.msra.mxu0 0.0
      %1133 = vmatprep.subr.mxu0 0.0
      %1134 = vmatpush1.msra.mxu0 0.0
      %1135 = vmatprep.subr.mxu0 0.0
      %1136 = vmatpush1.msra.mxu0 0.0
      %1137 = vmatprep.subr.mxu0 0.0
      %1138 = vmatpush1.msra.mxu0 0.0
      %1139 = vmatprep.subr.mxu0 0.0
      %1140 = vmatpush1.msra.mxu0 0.0
      %1141 = vmatprep.subr.mxu0 0.0
      %1142 = vmatpush1.msra.mxu0 0.0
      %1143 = vmatprep.subr.mxu0 0.0
      %1144 = vmatpush1.msra.mxu0 0.0
      %1145 = vmatprep.subr.mxu0 0.0
      %1146 = vmatpush1.msra.mxu0 0.0
      %1147 = vmatprep.subr.mxu0 0.0
      %1148 = vmatpush1.msra.mxu0 0.0
      %1149 = vmatprep.subr.mxu0 0.0
      %1150 = vmatpush1.msra.mxu0 0.0
      %1151 = vmatprep.subr.mxu0 0.0
      %1152 = vmatpush1.msra.mxu0 0.0
      %1153 = vmatprep.subr.mxu0 0.0
      %1154 = vmatpush1.msra.mxu0 0.0
      %1155 = vmatprep.subr.mxu0 0.0
      %1156 = vmatpush1.msra.mxu0 0.0
      %1157 = vmatprep.subr.mxu0 0.0
      %1158 = vmatpush1.msra.mxu0 0.0
      %1159 = vmatprep.subr.mxu0 0.0
      %1160 = vmatpush1.msra.mxu0 0.0
      %1161 = vmatprep.subr.mxu0 0.0
      %1162 = vmatpush1.msra.mxu0 0.0
      %1163 = vmatprep.subr.mxu0 0.0
      %1164 = vmatpush1.msra.mxu0 0.0
      %1165 = vmatprep.subr.mxu0 0.0
      %1166 = vmatpush1.msra.mxu0 0.0
      %1167 = vmatprep.subr.mxu0 0.0
      %1168 = vmatpush1.msra.mxu0 0.0
      %1169 = vmatprep.subr.mxu0 0.0
      %1170 = vmatpush1.msra.mxu0 0.0
      %1171 = vmatprep.subr.mxu0 0.0
      %1172 = vmatpush1.msra.mxu0 0.0
      %1173 = vmatprep.subr.mxu0 0.0
      %1174 = vmatpush1.msra.mxu0 0.0
      %1175 = vmatprep.mubr.f32.mxu0 0.0
      %1176 = vmatmul.mubr.f32.gmra.mrb[0].mxu0 %v1109
      %v1177 = vpop.f32.mrb[0].mxu0
      %v1178 = vadd.f32 0.0, %v1177
      %v1179 = vpop.f32.mrb[0].mxu0
      %v1180 = vadd.f32 0.0, %v1179
      %1181 = vdwg.mxu0
      %v1182 = vadd.f32 %v1178, %v1180
      %1183 = vadd.xlane.f32.xlu0 %v1182
      %v1184 = vpop.xlane.xlu0 %1183
      %v1185 = vmul.f32 %v1184, %v582
      %v1186 = vsub.f32 %v1178, %v1185
      %v1187 = vsub.f32 %v1180, %v1185
      %v1188 = vmul.f32 %v1186, %v1186
      %v1189 = vmul.f32 %v1187, %v1187
      %v1190 = vadd.f32 %v1188, %v1189
      %1191 = vadd.xlane.f32.xlu0 %v1190
      %v1192 = vpop.xlane.xlu0 %1191
      %v1193 = vmul.f32 %v1192, %v582
      %v1194 = vadd.f32 %v1193, 1e-05
      %v1195 = vrsqrt.pop %v1194
      %v1196 = vmul.f32 %v1186, %v1195
      %v1197 = vmul.f32 %v1187, %v1195
      %s1198 = scalar_lea.vmem %s2, 16
      %v1199 = vld [vmem:[%s1198] sm:$0xff]
      %1201 = vset.pattern.permute.xlu0 0
      %1202 = vperm.xlu0 %1201, %v1199
      %v1203 = vpop.permute.xlu0 %1202
      %v1205 = vmul.f32 %v1196, %v1203
      %v1206 = vmul.f32 %v1197, %v1203
      %s1207 = scalar_lea.vmem %s3, 16
      %v1208 = vld [vmem:[%s1207] sm:$0xff]
      %1210 = vset.pattern.permute.xlu0 0
      %1211 = vperm.xlu0 %1210, %v1208
      %v1212 = vpop.permute.xlu0 %1211
      %v1214 = vadd.f32 %v1205, %v1212
      %v1215 = vadd.f32 %v1206, %v1212
      %vm1216 = vcmp.ge.f32.partialorder %v1214, 0.0
      %vm1217 = vcmp.ge.f32.partialorder %v1215, 0.0
      %v1218 = vmul.f32 %v1214, 0.01
      %v1219 = vmul.f32 %v1215, 0.01
      %v1220 = vsel %vm1216, %v1214, %v1218
      %v1221 = vsel %vm1217, %v1215, %v1219
      %1222 = vst [vmem:[#allocation2 + $0x8] sm:$0xff] %v1220
      %1223 = vst [vmem:[#allocation2 + $0x10] sm:$0xff] %v1221
      %v1224 = vld [vmem:[#allocation2] sm:$0xff]
      %v1225 = vld [vmem:[#allocation2 + $0x8] sm:$0xff]
      %v1226 = vld [vmem:[#allocation2 + $0x10] sm:$0xff]
      %v1227 = vmul.f32 %v1224, %v265
      %v1228 = vmul.f32 %v1225, %v269
      %v1229 = vmul.f32 %v1226, %v267
      %1233 = vrot.lane.b32.xlu0 %v1227, 17
      %v1234 = vpop.permute.xlu0 %1233
      %1235 = vrot.lane.b32.xlu0 %v1228, 17
      %v1236 = vpop.permute.xlu0 %1235
      %1237 = vrot.lane.b32.xlu0 %v1229, 17
      %v1238 = vpop.permute.xlu0 %1237
      %v1239 = vsel %vm285, %v1234, %v1236
      %v1240 = vsel %vm285, %v1236, %v1238
      %1243 = vst [vmem:[#allocation3] sm:$0xff] %v1239
      %1244 = vst [vmem:[#allocation3 + $0x8] sm:$0xff] %v1240
      %v1245 = vld [vmem:[#allocation2] sm:$0xff]
      %v1246 = vld [vmem:[#allocation2 + $0x8] sm:$0xff]
      %v1247 = vld [vmem:[#allocation2 + $0x10] sm:$0xff]
      %1251 = vrot.lane.b32.xlu0 %v1245, 16
      %v1252 = vpop.permute.xlu0 %1251
      %1253 = vrot.lane.b32.xlu0 %v1246, 16
      %v1254 = vpop.permute.xlu0 %1253
      %1255 = vrot.lane.b32.xlu0 %v1247, 16
      %v1256 = vpop.permute.xlu0 %1255
      %v1257 = vsel %vm304, %v1252, %v1254
      %v1258 = vsel %vm304, %v1254, %v1256
      %1261 = vst [vmem:[#allocation3 + $0x10] sm:$0xff] %v1257
      %1262 = vst [vmem:[#allocation3 + $0x18] sm:$0xff] %v1258
      %v1263 = vld [vmem:[#allocation2] sm:$0xff]
      %v1264 = vld [vmem:[#allocation2 + $0x8] sm:$0xff]
      %v1265 = vld [vmem:[#allocation2 + $0x10] sm:$0xff]
      %v1266 = vmul.f32 %v1263, %v317
      %v1267 = vmul.f32 %v1264, %v321
      %v1268 = vmul.f32 %v1265, %v319
      %1272 = vrot.lane.b32.xlu0 %v1266, 15
      %v1273 = vpop.permute.xlu0 %1272
      %1274 = vrot.lane.b32.xlu0 %v1267, 15
      %v1275 = vpop.permute.xlu0 %1274
      %1276 = vrot.lane.b32.xlu0 %v1268, 15
      %v1277 = vpop.permute.xlu0 %1276
      %v1278 = vsel %vm337, %v1273, %v1275
      %v1279 = vsel %vm337, %v1275, %v1277
      %1282 = vst [vmem:[#allocation3 + $0x20] sm:$0xff] %v1278
      %1283 = vst [vmem:[#allocation3 + $0x28] sm:$0xff] %v1279
      %v1284 = vld [vmem:[#allocation2] sm:$0xff]
      %v1285 = vld [vmem:[#allocation2 + $0x8] sm:$0xff]
      %v1286 = vld [vmem:[#allocation2 + $0x10] sm:$0xff]
      %v1287 = vmul.f32 %v1284, %v348
      %v1288 = vmul.f32 %v1285, %v352
      %v1289 = vmul.f32 %v1286, %v350
      %1293 = vrot.lane.b32.xlu0 %v1287, 1
      %v1294 = vpop.permute.xlu0 %1293
      %1295 = vrot.lane.b32.xlu0 %v1288, 1
      %v1296 = vpop.permute.xlu0 %1295
      %1297 = vrot.lane.b32.xlu0 %v1289, 1
      %v1298 = vpop.permute.xlu0 %1297
      %v1299 = vsel %vm368, %v1294, %v1296
      %v1300 = vsel %vm368, %v1296, %v1298
      %1303 = vst [vmem:[#allocation3 + $0x30] sm:$0xff] %v1299
      %1304 = vst [vmem:[#allocation3 + $0x38] sm:$0xff] %v1300
      %v1305 = vld [vmem:[#allocation2 + $0x8] sm:$0xff]
      %v1306 = vld [vmem:[#allocation2 + $0x10] sm:$0xff]
      %1307 = vst [vmem:[#allocation3 + $0x40] sm:$0xff] %v1305
      %1308 = vst [vmem:[#allocation3 + $0x48] sm:$0xff] %v1306
      %v1309 = vld [vmem:[#allocation2 + $0x8] sm:$0xff]
      %v1310 = vld [vmem:[#allocation2 + $0x10] sm:$0xff]
      %v1311 = vld [vmem:[#allocation2 + $0x18] sm:$0xff]
      %v1312 = vmul.f32 %v1309, %v383
      %v1313 = vmul.f32 %v1310, %v386
      %v1314 = vmul.f32 %v1311, %v385
      %1318 = vrot.lane.b32.xlu0 %v1312, 127
      %v1319 = vpop.permute.xlu0 %1318
      %1320 = vrot.lane.b32.xlu0 %v1313, 127
      %v1321 = vpop.permute.xlu0 %1320
      %1322 = vrot.lane.b32.xlu0 %v1314, 127
      %v1323 = vpop.permute.xlu0 %1322
      %v1324 = vsel %vm351, %v1319, %v1321
      %v1325 = vsel %vm351, %v1321, %v1323
      %1328 = vst [vmem:[#allocation3 + $0x50] sm:$0xff] %v1324
      %1329 = vst [vmem:[#allocation3 + $0x58] sm:$0xff] %v1325
      %v1330 = vld [vmem:[#allocation2 + $0x8] sm:$0xff]
      %v1331 = vld [vmem:[#allocation2 + $0x10] sm:$0xff]
      %v1332 = vld [vmem:[#allocation2 + $0x18] sm:$0xff]
      %v1333 = vmul.f32 %v1330, %v412
      %v1334 = vmul.f32 %v1331, %v415
      %v1335 = vmul.f32 %v1332, %v414
      %1339 = vrot.lane.b32.xlu0 %v1333, 113
      %v1340 = vpop.permute.xlu0 %1339
      %1341 = vrot.lane.b32.xlu0 %v1334, 113
      %v1342 = vpop.permute.xlu0 %1341
      %1343 = vrot.lane.b32.xlu0 %v1335, 113
      %v1344 = vpop.permute.xlu0 %1343
      %v1345 = vsel %vm320, %v1340, %v1342
      %v1346 = vsel %vm320, %v1342, %v1344
      %1349 = vst [vmem:[#allocation3 + $0x60] sm:$0xff] %v1345
      %1350 = vst [vmem:[#allocation3 + $0x68] sm:$0xff] %v1346
      %v1351 = vld [vmem:[#allocation2 + $0x8] sm:$0xff]
      %v1352 = vld [vmem:[#allocation2 + $0x10] sm:$0xff]
      %v1353 = vld [vmem:[#allocation2 + $0x18] sm:$0xff]
      %1357 = vrot.lane.b32.xlu0 %v1351, 112
      %v1358 = vpop.permute.xlu0 %1357
      %1359 = vrot.lane.b32.xlu0 %v1352, 112
      %v1360 = vpop.permute.xlu0 %1359
      %1361 = vrot.lane.b32.xlu0 %v1353, 112
      %v1362 = vpop.permute.xlu0 %1361
      %v1363 = vsel %vm449, %v1358, %v1360
      %v1364 = vsel %vm449, %v1360, %v1362
      %1367 = vst [vmem:[#allocation3 + $0x70] sm:$0xff] %v1363
      %1368 = vst [vmem:[#allocation3 + $0x78] sm:$0xff] %v1364
      %v1369 = vld [vmem:[#allocation2 + $0x8] sm:$0xff]
      %v1370 = vld [vmem:[#allocation2 + $0x10] sm:$0xff]
      %v1371 = vld [vmem:[#allocation2 + $0x18] sm:$0xff]
      %v1372 = vmul.f32 %v1369, %v460
      %v1373 = vmul.f32 %v1370, %v463
      %v1374 = vmul.f32 %v1371, %v462
      %1378 = vrot.lane.b32.xlu0 %v1372, 111
      %v1379 = vpop.permute.xlu0 %1378
      %1380 = vrot.lane.b32.xlu0 %v1373, 111
      %v1381 = vpop.permute.xlu0 %1380
      %1382 = vrot.lane.b32.xlu0 %v1374, 111
      %v1383 = vpop.permute.xlu0 %1382
      %v1384 = vsel %vm268, %v1379, %v1381
      %v1385 = vsel %vm268, %v1381, %v1383
      %1388 = vst [vmem:[#allocation3 + $0x80] sm:$0xff] %v1384
      %1389 = vst [vmem:[#allocation3 + $0x88] sm:$0xff] %v1385
      %s1390 = scalar_lea.vmem %s1, 24
      %v1391 = vld [vmem:[%s1390] sm:$0xff]
      %v1392 = vld [vmem:[#allocation3] sm:$0xff]
      %v1393 = vld [vmem:[#allocation3 + $0x8] sm:$0xff]
      %v1394 = vld [vmem:[#allocation3 + $0x10] sm:$0xff]
      %v1395 = vld [vmem:[#allocation3 + $0x18] sm:$0xff]
      %v1396 = vld [vmem:[#allocation3 + $0x20] sm:$0xff]
      %v1397 = vld [vmem:[#allocation3 + $0x28] sm:$0xff]
      %v1398 = vld [vmem:[#allocation3 + $0x30] sm:$0xff]
      %v1399 = vld [vmem:[#allocation3 + $0x38] sm:$0xff]
      %v1400 = vld [vmem:[#allocation3 + $0x40] sm:$0xff]
      %v1401 = vld [vmem:[#allocation3 + $0x48] sm:$0xff]
      %v1402 = vld [vmem:[#allocation3 + $0x50] sm:$0xff]
      %v1403 = vld [vmem:[#allocation3 + $0x58] sm:$0xff]
      %v1404 = vld [vmem:[#allocation3 + $0x60] sm:$0xff]
      %v1405 = vld [vmem:[#allocation3 + $0x68] sm:$0xff]
      %v1406 = vld [vmem:[#allocation3 + $0x70] sm:$0xff]
      %v1407 = vld [vmem:[#allocation3 + $0x78] sm:$0xff]
      %v1408 = vld [vmem:[#allocation3 + $0x80] sm:$0xff]
      %v1409 = vld [vmem:[#allocation3 + $0x88] sm:$0xff]
      %v1411 = vsel %vm504, %v1391, 0
      %1413 = vmatprep.subr.mxu0 %v1393
      %1414 = vmatpush1.msra.mxu0 %v1392
      %1415 = vmatprep.subr.mxu0 %v1395
      %1416 = vmatpush1.msra.mxu0 %v1394
      %1417 = vmatprep.subr.mxu0 %v1397
      %1418 = vmatpush1.msra.mxu0 %v1396
      %1419 = vmatprep.subr.mxu0 %v1399
      %1420 = vmatpush1.msra.mxu0 %v1398
      %1421 = vmatprep.subr.mxu0 %v1401
      %1422 = vmatpush1.msra.mxu0 %v1400
      %1423 = vmatprep.subr.mxu0 %v1403
      %1424 = vmatpush1.msra.mxu0 %v1402
      %1425 = vmatprep.subr.mxu0 %v1405
      %1426 = vmatpush1.msra.mxu0 %v1404
      %1427 = vmatprep.subr.mxu0 %v1407
      %1428 = vmatpush1.msra.mxu0 %v1406
      %1429 = vmatprep.subr.mxu0 %v1409
      %1430 = vmatpush1.msra.mxu0 %v1408
      %1431 = vmatprep.subr.mxu0 0.0
      %1432 = vmatpush1.msra.mxu0 0.0
      %1433 = vmatprep.subr.mxu0 0.0
      %1434 = vmatpush1.msra.mxu0 0.0
      %1435 = vmatprep.subr.mxu0 0.0
      %1436 = vmatpush1.msra.mxu0 0.0
      %1437 = vmatprep.subr.mxu0 0.0
      %1438 = vmatpush1.msra.mxu0 0.0
      %1439 = vmatprep.subr.mxu0 0.0
      %1440 = vmatpush1.msra.mxu0 0.0
      %1441 = vmatprep.subr.mxu0 0.0
      %1442 = vmatpush1.msra.mxu0 0.0
      %1443 = vmatprep.subr.mxu0 0.0
      %1444 = vmatpush1.msra.mxu0 0.0
      %1445 = vmatprep.subr.mxu0 0.0
      %1446 = vmatpush1.msra.mxu0 0.0
      %1447 = vmatprep.subr.mxu0 0.0
      %1448 = vmatpush1.msra.mxu0 0.0
      %1449 = vmatprep.subr.mxu0 0.0
      %1450 = vmatpush1.msra.mxu0 0.0
      %1451 = vmatprep.subr.mxu0 0.0
      %1452 = vmatpush1.msra.mxu0 0.0
      %1453 = vmatprep.subr.mxu0 0.0
      %1454 = vmatpush1.msra.mxu0 0.0
      %1455 = vmatprep.subr.mxu0 0.0
      %1456 = vmatpush1.msra.mxu0 0.0
      %1457 = vmatprep.subr.mxu0 0.0
      %1458 = vmatpush1.msra.mxu0 0.0
      %1459 = vmatprep.subr.mxu0 0.0
      %1460 = vmatpush1.msra.mxu0 0.0
      %1461 = vmatprep.subr.mxu0 0.0
      %1462 = vmatpush1.msra.mxu0 0.0
      %1463 = vmatprep.subr.mxu0 0.0
      %1464 = vmatpush1.msra.mxu0 0.0
      %1465 = vmatprep.subr.mxu0 0.0
      %1466 = vmatpush1.msra.mxu0 0.0
      %1467 = vmatprep.subr.mxu0 0.0
      %1468 = vmatpush1.msra.mxu0 0.0
      %1469 = vmatprep.subr.mxu0 0.0
      %1470 = vmatpush1.msra.mxu0 0.0
      %1471 = vmatprep.subr.mxu0 0.0
      %1472 = vmatpush1.msra.mxu0 0.0
      %1473 = vmatprep.subr.mxu0 0.0
      %1474 = vmatpush1.msra.mxu0 0.0
      %1475 = vmatprep.subr.mxu0 0.0
      %1476 = vmatpush1.msra.mxu0 0.0
      %1477 = vmatprep.mubr.f32.mxu0 0.0
      %1478 = vmatmul.mubr.f32.gmra.mrb[0].mxu0 %v1411
      %v1479 = vpop.f32.mrb[0].mxu0
      %v1480 = vadd.f32 0.0, %v1479
      %v1481 = vpop.f32.mrb[0].mxu0
      %v1482 = vadd.f32 0.0, %v1481
      %1483 = vdwg.mxu0
      %v1484 = vadd.f32 %v1480, %v1482
      %1485 = vadd.xlane.f32.xlu0 %v1484
      %v1486 = vpop.xlane.xlu0 %1485
      %v1487 = vmul.f32 %v1486, %v582
      %v1488 = vsub.f32 %v1480, %v1487
      %v1489 = vsub.f32 %v1482, %v1487
      %v1490 = vmul.f32 %v1488, %v1488
      %v1491 = vmul.f32 %v1489, %v1489
      %v1492 = vadd.f32 %v1490, %v1491
      %1493 = vadd.xlane.f32.xlu0 %v1492
      %v1494 = vpop.xlane.xlu0 %1493
      %v1495 = vmul.f32 %v1494, %v582
      %v1496 = vadd.f32 %v1495, 1e-05
      %v1497 = vrsqrt.pop %v1496
      %v1498 = vmul.f32 %v1488, %v1497
      %v1499 = vmul.f32 %v1489, %v1497
      %s1500 = scalar_lea.vmem %s2, 24
      %v1501 = vld [vmem:[%s1500] sm:$0xff]
      %1503 = vset.pattern.permute.xlu0 0
      %1504 = vperm.xlu0 %1503, %v1501
      %v1505 = vpop.permute.xlu0 %1504
      %v1507 = vmul.f32 %v1498, %v1505
      %v1508 = vmul.f32 %v1499, %v1505
      %s1509 = scalar_lea.vmem %s3, 24
      %v1510 = vld [vmem:[%s1509] sm:$0xff]
      %1512 = vset.pattern.permute.xlu0 0
      %1513 = vperm.xlu0 %1512, %v1510
      %v1514 = vpop.permute.xlu0 %1513
      %v1516 = vadd.f32 %v1507, %v1514
      %v1517 = vadd.f32 %v1508, %v1514
      %vm1518 = vcmp.ge.f32.partialorder %v1516, 0.0
      %vm1519 = vcmp.ge.f32.partialorder %v1517, 0.0
      %v1520 = vmul.f32 %v1516, 0.01
      %v1521 = vmul.f32 %v1517, 0.01
      %v1522 = vsel %vm1518, %v1516, %v1520
      %v1523 = vsel %vm1519, %v1517, %v1521
      %1524 = vst [vmem:[%s197] sm:$0xff] %v1522
      %1525 = vst [vmem:[%s197 + $0x8] sm:$0xff] %v1523
      %p1526 = scmp.lt.s32.totalorder %s15, 1
      %s1527 = scalar_select %p1526, %s15, 1
      %s1528 = smul.addr %s1527, 2
      %s1529 = smul.addr %s1528, 8
      %s1530 = scalar_lea.vmem %s4, %s1529
      // Predicated region
      $region37: #{unet_stacked_block_forward.1} parent=35 // pred_check
        %p1531 = pneg %p122
      $region38: #{unet_stacked_block_forward.1} parent=35 // pred_check_branch
        %1533 = sbr.rel (%p1531) target = $region40
      $region39: #{unet_stacked_block_forward.1} parent=35 // pred_region
        _
      $region40: #{unet_stacked_block_forward.1} parent=35 // pred_fallthru
        _
    $region36: #{unet_stacked_block_forward.1} parent=5 // pred_fallthru
      _
    %p1534 = scmp.le.s32.totalorder 2, %s10
    // Predicated region
    $region41: #{unet_stacked_block_forward.1} parent=5 // pred_check
      %p1535 = pneg %p1534
    $region42: #{unet_stacked_block_forward.1} parent=5 // pred_check_branch
      %1537 = sbr.rel (%p1535) target = $region44
    $region43: #{unet_stacked_block_forward.1} parent=5 // pred_region
      %s1538 = ssub.s32 %s10, 2
      // Predicated region
      $region45: #{unet_stacked_block_forward.1} parent=43 // pred_check
        %p1539 = pneg %p128
      $region46: #{unet_stacked_block_forward.1} parent=43 // pred_check_branch
        %1541 = sbr.rel (%p1539) target = $region48
      $region47: #{unet_stacked_block_forward.1} parent=43 // pred_region
        %p1542 = scmp.lt.s32.totalorder %s16, 1
        %s1543 = scalar_select %p1542, %s16, 1
        %s1544 = smul.addr %s1543, 2
        %s1545 = smul.addr %s1544, 8
        %s1546 = scalar_lea.vmem %s4, %s1545
      $region48: #{unet_stacked_block_forward.1} parent=43 // pred_fallthru
        _
    $region44: #{unet_stacked_block_forward.1} parent=5 // pred_fallthru
      _
  $region6: #{unet_stacked_block_forward.1} parent=0 // loop_footer
    %s14 = sadd.s32 1, %s10
  $region7: #{unet_stacked_block_forward.1} parent=0 // loop_footer_branch
    %9 = sbr.rel target = $region3
  $region8: #{unet_stacked_block_forward.1} parent=0 // loop_exit
    _

</llo_original>
